<compile_context>
chip_gen: v7x
topology: tpu7x:2x2x1
jax: 0.10.0
libtpu: 0.0.40
codegen_flags: <defaults>
</compile_context>

<pallas_src>
import functools

import numpy as np
import jax
import jax.numpy as jnp
from jax.experimental import pallas as pl
from jax.experimental.pallas import tpu as pltpu


# ----------------------------------------------------------------------------
# Fused Pallas kernel: all branches, all channels, one batch element per step.
# ----------------------------------------------------------------------------
def _dms_conv_kernel(w_ref, b_ref, x_ref, o_ref, xpad_ref, zpad_ref,
                     *, C, K, T, halo):
    """Fused DMS_Conv forward for one batch element.

    w_ref : SMEM (6*C*K,) f32  renormed weights, conv order:
            [ts1, ts2_a(1->C), ts2_b(dw), ts3_a(1->C), ts3_b(dw), ts3_c(dw)]
    b_ref : SMEM (6*C,)   f32  biases (same order)
    x_ref : VMEM (1, H, T)     input slab (single input channel)
    o_ref : VMEM (1, 3C, H, T) output slab in final NCHW channel order
    xpad_ref, zpad_ref : VMEM (H, T + 2*halo) f32 zero-halo staging buffers
    """
    pad_l = (K - 1) // 2
    CK = C * K

    # Zero the halo buffers once per grid step, stage padded x (lane-aligned
    # payload store at offset `halo`).
    xpad_ref[...] = jnp.zeros_like(xpad_ref)
    zpad_ref[...] = jnp.zeros_like(zpad_ref)
    xpad_ref[:, halo:halo + T] = x_ref[0]

    # Hoist the K lane-shifted views of x: computed once per grid step,
    # reused by all 3*C "1 -> C" filters below.
    xs = [xpad_ref[:, halo - pad_l + k: halo - pad_l + k + T] for k in range(K)]

    def conv_1toC(conv_idx, c):
        base = conv_idx * CK + c * K
        acc = xs[0] * w_ref[base]
        for k in range(1, K):
            acc = acc + xs[k] * w_ref[base + k]
        return acc + b_ref[conv_idx * C + c]

    def conv_depthwise(conv_idx, c, z):
        # Stage padded z (this channel only) in VMEM, then run the K taps.
        zpad_ref[:, halo:halo + T] = z
        base = conv_idx * CK + c * K
        acc = zpad_ref[:, halo - pad_l: halo - pad_l + T] * w_ref[base]
        for k in range(1, K):
            acc = acc + zpad_ref[:, halo - pad_l + k: halo - pad_l + k + T] * w_ref[base + k]
        return acc + b_ref[conv_idx * C + c]

    for c in range(C):
        # ts1: single 1->C conv, written straight to its NCHW channel slot.
        o_ref[0, c, :, :] = conv_1toC(0, c)
        # ts2: 1->C conv then depthwise conv; intermediate stays in VMEM.
        z2 = conv_1toC(1, c)
        o_ref[0, C + c, :, :] = conv_depthwise(2, c, z2)
        # ts3: 1->C conv then two depthwise convs; intermediates stay in VMEM.
        z3 = conv_1toC(3, c)
        z3 = conv_depthwise(4, c, z3)
        o_ref[0, 2 * C + c, :, :] = conv_depthwise(5, c, z3)


# ----------------------------------------------------------------------------
# Glue: weight renorm (Conv2dWithConstraint), init, and the fused forward.
# ----------------------------------------------------------------------------
def renorm_rows(w, max_norm=2.0):
    # torch.renorm(weight, p=2, dim=0, maxnorm=max_norm): each output channel's
    # filter rescaled to L2 norm <= max_norm (with torch's 1e-7 eps).
    n = jnp.sqrt(jnp.sum(w * w, axis=1, keepdims=True))
    scale = jnp.where(n > max_norm, max_norm / (n + 1e-7), 1.0)
    return w * scale


def init_conv_params(key, c_out, k):
    # Deterministic init mimicking torch Conv2d default scale (fan_in = 1*1*k).
    bound = 1.0 / np.sqrt(k)
    kw, kb = jax.random.split(key)
    w = jax.random.uniform(kw, (c_out, k), jnp.float32, -bound, bound)
    b = jax.random.uniform(kb, (c_out,), jnp.float32, -bound, bound)
    return w, b


def dms_conv_forward(x_nchw, params):
    (w1a, b1a), (w2a, b2a), (w2b, b2b), (w3a, b3a), (w3b, b3b), (w3c, b3c) = params
    N, Cin, H, T = x_nchw.shape
    assert Cin == 1
    C, K = w1a.shape

    # Conv2dWithConstraint renorms its weight (max_norm=2) on every forward.
    ws = [renorm_rows(w) for w in (w1a, w2a, w2b, w3a, w3b, w3c)]
    bs = [b1a, b2a, b2b, b3a, b3b, b3c]
    # Flat 1-D SMEM layouts (avoid 2-D SMEM padding blow-up).
    w_all = jnp.concatenate([w.reshape(-1) for w in ws]).astype(jnp.float32)
    b_all = jnp.concatenate(bs).astype(jnp.float32)

    x_slab = x_nchw[:, 0, :, :].astype(jnp.float32)        # (N, H, T)

    pad_l = (K - 1) // 2
    pad_r = (K - 1) - pad_l
    halo = ((max(pad_l, pad_r, 1) + 127) // 128) * 128     # 128-aligned halo

    kernel = functools.partial(_dms_conv_kernel, C=C, K=K, T=T, halo=halo)
    return pl.pallas_call(
        kernel,
        out_shape=jax.ShapeDtypeStruct((N, 3 * C, H, T), jnp.float32),
        grid_spec=pltpu.PrefetchScalarGridSpec(
            num_scalar_prefetch=0,
            grid=(N,),
            in_specs=[
                pl.BlockSpec(memory_space=pltpu.MemorySpace.SMEM),   # w_all (6*C*K,)
                pl.BlockSpec(memory_space=pltpu.MemorySpace.SMEM),   # b_all (6*C,)
                pl.BlockSpec((1, H, T), lambda n: (n, 0, 0)),        # x slab
            ],
            out_specs=pl.BlockSpec((1, 3 * C, H, T), lambda n: (n, 0, 0, 0)),
            scratch_shapes=[
                pltpu.VMEM((H, T + 2 * halo), jnp.float32),   # padded x
                pltpu.VMEM((H, T + 2 * halo), jnp.float32),   # padded depthwise intermediate
            ],
        ),
        compiler_params=pltpu.CompilerParams(
            dimension_semantics=("parallel",),
            vmem_limit_bytes=64 * 1024 * 1024,
        ),
    )(w_all, b_all, x_slab)


# ----------------------------------------------------------------------------
# Pure-JAX reference (lax conv) for correctness checking.
# ----------------------------------------------------------------------------
def ref_conv_nchw(x, w, b, groups):
    C, K = w.shape
    pad_l = (K - 1) // 2
    pad_r = (K - 1) - pad_l
    w4 = w.reshape(C, 1, 1, K)
    y = jax.lax.conv_general_dilated(
        x, w4, window_strides=(1, 1), padding=((0, 0), (pad_l, pad_r)),
        dimension_numbers=("NCHW", "OIHW", "NCHW"),
        feature_group_count=groups)
    return y + b.reshape(1, C, 1, 1)


def ref_forward(x, params):
    (w1a, b1a), (w2a, b2a), (w2b, b2b), (w3a, b3a), (w3b, b3b), (w3c, b3c) = params
    C = w1a.shape[0]
    w1a, w2a, w2b = renorm_rows(w1a), renorm_rows(w2a), renorm_rows(w2b)
    w3a, w3b, w3c = renorm_rows(w3a), renorm_rows(w3b), renorm_rows(w3c)

    y1 = ref_conv_nchw(x, w1a, b1a, 1)
    y2 = ref_conv_nchw(ref_conv_nchw(x, w2a, b2a, 1), w2b, b2b, C)
    z3 = ref_conv_nchw(ref_conv_nchw(x, w3a, b3a, 1), w3b, b3b, C)
    y3 = ref_conv_nchw(z3, w3c, b3c, C)
    return jnp.concatenate([y1, y2, y3], axis=1)


if __name__ == "__main__":
    key = jax.random.PRNGKey(0)
    N, H, T = 2, 8, 128                # batch, electrode rows, time samples
    channels, timekernel = 4, 5        # small but structurally faithful DMS_Conv

    k_x, k1, k2a, k2b, k3a, k3b, k3c = jax.random.split(key, 7)
    x = jax.random.normal(k_x, (N, 1, H, T), jnp.float32)

    params = [
        init_conv_params(k1, channels, timekernel),    # ts1 conv (1->C)
        init_conv_params(k2a, channels, timekernel),   # ts2 conv 1 (1->C)
        init_conv_params(k2b, channels, timekernel),   # ts2 conv 2 (depthwise)
        init_conv_params(k3a, channels, timekernel),   # ts3 conv 1 (1->C)
        init_conv_params(k3b, channels, timekernel),   # ts3 conv 2 (depthwise)
        init_conv_params(k3c, channels, timekernel),   # ts3 conv 3 (depthwise)
    ]

    out = jax.jit(dms_conv_forward)(x, params)
    out = jax.block_until_ready(out)

    ref = ref_forward(x, params)
    assert out.shape == (N, 3 * channels, H, T), out.shape
    np.testing.assert_allclose(np.asarray(out), np.asarray(ref), rtol=1e-4, atol=1e-4)
    print("KERNEL_OK")
</pallas_src>

<mosaic_0001>
module attributes {stable_mosaic.version = 11 : i64} {
  func.func @_dms_conv_kernel(%arg0: i32, %arg1: memref<120xf32, #tpu.memory_space<smem>>, %arg2: memref<24xf32, #tpu.memory_space<smem>>, %arg3: memref<1x8x128xf32, #tpu.memory_space<vmem>>, %arg4: memref<1x12x8x128xf32, #tpu.memory_space<vmem>>, %arg5: memref<8x384xf32, #tpu.memory_space<vmem>>, %arg6: memref<8x384xf32, #tpu.memory_space<vmem>>) attributes {dimension_semantics = [#tpu.dimension_semantics<parallel>], iteration_bounds = array<i64: 2>, scalar_prefetch = 0 : i64, scratch_operands = 2 : i64, tpu.core_type = #tpu.core_type<tc>, window_params = [{transform_indices = @transform_0, window_bounds = array<i64: 120>}, {transform_indices = @transform_1, window_bounds = array<i64: 24>}, {transform_indices = @transform_2, window_bounds = array<i64: 1, 8, 128>}, {transform_indices = @transform_3, window_bounds = array<i64: 1, 12, 8, 128>}]} {
    %cst = arith.constant 0.000000e+00 : f32
    %0 = vector.broadcast %cst : f32 to vector<8x384xf32>
    %c0 = arith.constant 0 : index
    %c0_0 = arith.constant 0 : index
    %1 = vector.load %arg5[%c0, %c0_0] : memref<8x384xf32, #tpu.memory_space<vmem>>, vector<8x384xf32>
    tpu.vector_store %arg5[%c0, %c0_0], %0 {strides = array<i32>} : memref<8x384xf32, #tpu.memory_space<vmem>>, vector<8x384xf32>,
    %cst_1 = arith.constant 0.000000e+00 : f32
    %2 = vector.broadcast %cst_1 : f32 to vector<8x384xf32>
    %c0_2 = arith.constant 0 : index
    %c0_3 = arith.constant 0 : index
    %3 = vector.load %arg6[%c0_2, %c0_3] : memref<8x384xf32, #tpu.memory_space<vmem>>, vector<8x384xf32>
    tpu.vector_store %arg6[%c0_2, %c0_3], %2 {strides = array<i32>} : memref<8x384xf32, #tpu.memory_space<vmem>>, vector<8x384xf32>,
    %c0_4 = arith.constant 0 : index
    %c0_5 = arith.constant 0 : index
    %c0_6 = arith.constant 0 : index
    %4 = vector.load %arg3[%c0_4, %c0_5, %c0_6] : memref<1x8x128xf32, #tpu.memory_space<vmem>>, vector<1x8x128xf32>
    %5 = vector.shape_cast %4 : vector<1x8x128xf32> to vector<8x128xf32>
    %c0_7 = arith.constant 0 : index
    %c128 = arith.constant 128 : index
    %6 = vector.load %arg5[%c0_7, %c128] : memref<8x384xf32, #tpu.memory_space<vmem>>, vector<8x128xf32>
    tpu.vector_store %arg5[%c0_7, %c128], %5 {strides = array<i32>} : memref<8x384xf32, #tpu.memory_space<vmem>>, vector<8x128xf32>,
    %c0_8 = arith.constant 0 : index
    %c126 = arith.constant 126 : index
    %7 = vector.load %arg5[%c0_8, %c126] : memref<8x384xf32, #tpu.memory_space<vmem>>, vector<8x128xf32>
    %c0_9 = arith.constant 0 : index
    %c127 = arith.constant 127 : index
    %8 = vector.load %arg5[%c0_9, %c127] : memref<8x384xf32, #tpu.memory_space<vmem>>, vector<8x128xf32>
    %c0_10 = arith.constant 0 : index
    %c128_11 = arith.constant 128 : index
    %9 = vector.load %arg5[%c0_10, %c128_11] : memref<8x384xf32, #tpu.memory_space<vmem>>, vector<8x128xf32>
    %c0_12 = arith.constant 0 : index
    %c129 = arith.constant 129 : index
    %10 = vector.load %arg5[%c0_12, %c129] : memref<8x384xf32, #tpu.memory_space<vmem>>, vector<8x128xf32>
    %c0_13 = arith.constant 0 : index
    %c130 = arith.constant 130 : index
    %11 = vector.load %arg5[%c0_13, %c130] : memref<8x384xf32, #tpu.memory_space<vmem>>, vector<8x128xf32>
    %c0_14 = arith.constant 0 : index
    %12 = memref.load %arg1[%c0_14] : memref<120xf32, #tpu.memory_space<smem>>
    %13 = vector.broadcast %12 : f32 to vector<8x128xf32>
    %14 = arith.mulf %7, %13 : vector<8x128xf32>
    %c1 = arith.constant 1 : index
    %15 = memref.load %arg1[%c1] : memref<120xf32, #tpu.memory_space<smem>>
    %16 = vector.broadcast %15 : f32 to vector<8x128xf32>
    %17 = arith.mulf %8, %16 : vector<8x128xf32>
    %18 = arith.addf %14, %17 : vector<8x128xf32>
    %c2 = arith.constant 2 : index
    %19 = memref.load %arg1[%c2] : memref<120xf32, #tpu.memory_space<smem>>
    %20 = vector.broadcast %19 : f32 to vector<8x128xf32>
    %21 = arith.mulf %9, %20 : vector<8x128xf32>
    %22 = arith.addf %18, %21 : vector<8x128xf32>
    %c3 = arith.constant 3 : index
    %23 = memref.load %arg1[%c3] : memref<120xf32, #tpu.memory_space<smem>>
    %24 = vector.broadcast %23 : f32 to vector<8x128xf32>
    %25 = arith.mulf %10, %24 : vector<8x128xf32>
    %26 = arith.addf %22, %25 : vector<8x128xf32>
    %c4 = arith.constant 4 : index
    %27 = memref.load %arg1[%c4] : memref<120xf32, #tpu.memory_space<smem>>
    %28 = vector.broadcast %27 : f32 to vector<8x128xf32>
    %29 = arith.mulf %11, %28 : vector<8x128xf32>
    %30 = arith.addf %26, %29 : vector<8x128xf32>
    %c0_15 = arith.constant 0 : index
    %31 = memref.load %arg2[%c0_15] : memref<24xf32, #tpu.memory_space<smem>>
    %32 = vector.broadcast %31 : f32 to vector<8x128xf32>
    %33 = arith.addf %30, %32 : vector<8x128xf32>
    %c0_16 = arith.constant 0 : index
    %c0_17 = arith.constant 0 : index
    %c0_18 = arith.constant 0 : index
    %c0_19 = arith.constant 0 : index
    %34 = vector.load %arg4[%c0_16, %c0_17, %c0_18, %c0_19] : memref<1x12x8x128xf32, #tpu.memory_space<vmem>>, vector<1x1x8x128xf32>
    %35 = vector.shape_cast %34 : vector<1x1x8x128xf32> to vector<8x128xf32>
    %36 = vector.shape_cast %33 : vector<8x128xf32> to vector<1x1x8x128xf32>
    tpu.vector_store %arg4[%c0_16, %c0_17, %c0_18, %c0_19], %36 {strides = array<i32>} : memref<1x12x8x128xf32, #tpu.memory_space<vmem>>, vector<1x1x8x128xf32>,
    %c20 = arith.constant 20 : index
    %37 = memref.load %arg1[%c20] : memref<120xf32, #tpu.memory_space<smem>>
    %38 = vector.broadcast %37 : f32 to vector<8x128xf32>
    %39 = arith.mulf %7, %38 : vector<8x128xf32>
    %c21 = arith.constant 21 : index
    %40 = memref.load %arg1[%c21] : memref<120xf32, #tpu.memory_space<smem>>
    %41 = vector.broadcast %40 : f32 to vector<8x128xf32>
    %42 = arith.mulf %8, %41 : vector<8x128xf32>
    %43 = arith.addf %39, %42 : vector<8x128xf32>
    %c22 = arith.constant 22 : index
    %44 = memref.load %arg1[%c22] : memref<120xf32, #tpu.memory_space<smem>>
    %45 = vector.broadcast %44 : f32 to vector<8x128xf32>
    %46 = arith.mulf %9, %45 : vector<8x128xf32>
    %47 = arith.addf %43, %46 : vector<8x128xf32>
    %c23 = arith.constant 23 : index
    %48 = memref.load %arg1[%c23] : memref<120xf32, #tpu.memory_space<smem>>
    %49 = vector.broadcast %48 : f32 to vector<8x128xf32>
    %50 = arith.mulf %10, %49 : vector<8x128xf32>
    %51 = arith.addf %47, %50 : vector<8x128xf32>
    %c24 = arith.constant 24 : index
    %52 = memref.load %arg1[%c24] : memref<120xf32, #tpu.memory_space<smem>>
    %53 = vector.broadcast %52 : f32 to vector<8x128xf32>
    %54 = arith.mulf %11, %53 : vector<8x128xf32>
    %55 = arith.addf %51, %54 : vector<8x128xf32>
    %c4_20 = arith.constant 4 : index
    %56 = memref.load %arg2[%c4_20] : memref<24xf32, #tpu.memory_space<smem>>
    %57 = vector.broadcast %56 : f32 to vector<8x128xf32>
    %58 = arith.addf %55, %57 : vector<8x128xf32>
    %c0_21 = arith.constant 0 : index
    %c128_22 = arith.constant 128 : index
    %59 = vector.load %arg6[%c0_21, %c128_22] : memref<8x384xf32, #tpu.memory_space<vmem>>, vector<8x128xf32>
    tpu.vector_store %arg6[%c0_21, %c128_22], %58 {strides = array<i32>} : memref<8x384xf32, #tpu.memory_space<vmem>>, vector<8x128xf32>,
    %c0_23 = arith.constant 0 : index
    %c126_24 = arith.constant 126 : index
    %60 = vector.load %arg6[%c0_23, %c126_24] : memref<8x384xf32, #tpu.memory_space<vmem>>, vector<8x128xf32>
    %c40 = arith.constant 40 : index
    %61 = memref.load %arg1[%c40] : memref<120xf32, #tpu.memory_space<smem>>
    %62 = vector.broadcast %61 : f32 to vector<8x128xf32>
    %63 = arith.mulf %60, %62 : vector<8x128xf32>
    %c0_25 = arith.constant 0 : index
    %c127_26 = arith.constant 127 : index
    %64 = vector.load %arg6[%c0_25, %c127_26] : memref<8x384xf32, #tpu.memory_space<vmem>>, vector<8x128xf32>
    %c41 = arith.constant 41 : index
    %65 = memref.load %arg1[%c41] : memref<120xf32, #tpu.memory_space<smem>>
    %66 = vector.broadcast %65 : f32 to vector<8x128xf32>
    %67 = arith.mulf %64, %66 : vector<8x128xf32>
    %68 = arith.addf %63, %67 : vector<8x128xf32>
    %c0_27 = arith.constant 0 : index
    %c128_28 = arith.constant 128 : index
    %69 = vector.load %arg6[%c0_27, %c128_28] : memref<8x384xf32, #tpu.memory_space<vmem>>, vector<8x128xf32>
    %c42 = arith.constant 42 : index
    %70 = memref.load %arg1[%c42] : memref<120xf32, #tpu.memory_space<smem>>
    %71 = vector.broadcast %70 : f32 to vector<8x128xf32>
    %72 = arith.mulf %69, %71 : vector<8x128xf32>
    %73 = arith.addf %68, %72 : vector<8x128xf32>
    %c0_29 = arith.constant 0 : index
    %c129_30 = arith.constant 129 : index
    %74 = vector.load %arg6[%c0_29, %c129_30] : memref<8x384xf32, #tpu.memory_space<vmem>>, vector<8x128xf32>
    %c43 = arith.constant 43 : index
    %75 = memref.load %arg1[%c43] : memref<120xf32, #tpu.memory_space<smem>>
    %76 = vector.broadcast %75 : f32 to vector<8x128xf32>
    %77 = arith.mulf %74, %76 : vector<8x128xf32>
    %78 = arith.addf %73, %77 : vector<8x128xf32>
    %c0_31 = arith.constant 0 : index
    %c130_32 = arith.constant 130 : index
    %79 = vector.load %arg6[%c0_31, %c130_32] : memref<8x384xf32, #tpu.memory_space<vmem>>, vector<8x128xf32>
    %c44 = arith.constant 44 : index
    %80 = memref.load %arg1[%c44] : memref<120xf32, #tpu.memory_space<smem>>
    %81 = vector.broadcast %80 : f32 to vector<8x128xf32>
    %82 = arith.mulf %79, %81 : vector<8x128xf32>
    %83 = arith.addf %78, %82 : vector<8x128xf32>
    %c8 = arith.constant 8 : index
    %84 = memref.load %arg2[%c8] : memref<24xf32, #tpu.memory_space<smem>>
    %85 = vector.broadcast %84 : f32 to vector<8x128xf32>
    %86 = arith.addf %83, %85 : vector<8x128xf32>
    %c0_33 = arith.constant 0 : index
    %c4_34 = arith.constant 4 : index
    %c0_35 = arith.constant 0 : index
    %c0_36 = arith.constant 0 : index
    %87 = vector.load %arg4[%c0_33, %c4_34, %c0_35, %c0_36] : memref<1x12x8x128xf32, #tpu.memory_space<vmem>>, vector<1x1x8x128xf32>
    %88 = vector.shape_cast %87 : vector<1x1x8x128xf32> to vector<8x128xf32>
    %89 = vector.shape_cast %86 : vector<8x128xf32> to vector<1x1x8x128xf32>
    tpu.vector_store %arg4[%c0_33, %c4_34, %c0_35, %c0_36], %89 {strides = array<i32>} : memref<1x12x8x128xf32, #tpu.memory_space<vmem>>, vector<1x1x8x128xf32>,
    %c60 = arith.constant 60 : index
    %90 = memref.load %arg1[%c60] : memref<120xf32, #tpu.memory_space<smem>>
    %91 = vector.broadcast %90 : f32 to vector<8x128xf32>
    %92 = arith.mulf %7, %91 : vector<8x128xf32>
    %c61 = arith.constant 61 : index
    %93 = memref.load %arg1[%c61] : memref<120xf32, #tpu.memory_space<smem>>
    %94 = vector.broadcast %93 : f32 to vector<8x128xf32>
    %95 = arith.mulf %8, %94 : vector<8x128xf32>
    %96 = arith.addf %92, %95 : vector<8x128xf32>
    %c62 = arith.constant 62 : index
    %97 = memref.load %arg1[%c62] : memref<120xf32, #tpu.memory_space<smem>>
    %98 = vector.broadcast %97 : f32 to vector<8x128xf32>
    %99 = arith.mulf %9, %98 : vector<8x128xf32>
    %100 = arith.addf %96, %99 : vector<8x128xf32>
    %c63 = arith.constant 63 : index
    %101 = memref.load %arg1[%c63] : memref<120xf32, #tpu.memory_space<smem>>
    %102 = vector.broadcast %101 : f32 to vector<8x128xf32>
    %103 = arith.mulf %10, %102 : vector<8x128xf32>
    %104 = arith.addf %100, %103 : vector<8x128xf32>
    %c64 = arith.constant 64 : index
    %105 = memref.load %arg1[%c64] : memref<120xf32, #tpu.memory_space<smem>>
    %106 = vector.broadcast %105 : f32 to vector<8x128xf32>
    %107 = arith.mulf %11, %106 : vector<8x128xf32>
    %108 = arith.addf %104, %107 : vector<8x128xf32>
    %c12 = arith.constant 12 : index
    %109 = memref.load %arg2[%c12] : memref<24xf32, #tpu.memory_space<smem>>
    %110 = vector.broadcast %109 : f32 to vector<8x128xf32>
    %111 = arith.addf %108, %110 : vector<8x128xf32>
    %c0_37 = arith.constant 0 : index
    %c128_38 = arith.constant 128 : index
    %112 = vector.load %arg6[%c0_37, %c128_38] : memref<8x384xf32, #tpu.memory_space<vmem>>, vector<8x128xf32>
    tpu.vector_store %arg6[%c0_37, %c128_38], %111 {strides = array<i32>} : memref<8x384xf32, #tpu.memory_space<vmem>>, vector<8x128xf32>,
    %c0_39 = arith.constant 0 : index
    %c126_40 = arith.constant 126 : index
    %113 = vector.load %arg6[%c0_39, %c126_40] : memref<8x384xf32, #tpu.memory_space<vmem>>, vector<8x128xf32>
    %c80 = arith.constant 80 : index
    %114 = memref.load %arg1[%c80] : memref<120xf32, #tpu.memory_space<smem>>
    %115 = vector.broadcast %114 : f32 to vector<8x128xf32>
    %116 = arith.mulf %113, %115 : vector<8x128xf32>
    %c0_41 = arith.constant 0 : index
    %c127_42 = arith.constant 127 : index
    %117 = vector.load %arg6[%c0_41, %c127_42] : memref<8x384xf32, #tpu.memory_space<vmem>>, vector<8x128xf32>
    %c81 = arith.constant 81 : index
    %118 = memref.load %arg1[%c81] : memref<120xf32, #tpu.memory_space<smem>>
    %119 = vector.broadcast %118 : f32 to vector<8x128xf32>
    %120 = arith.mulf %117, %119 : vector<8x128xf32>
    %121 = arith.addf %116, %120 : vector<8x128xf32>
    %c0_43 = arith.constant 0 : index
    %c128_44 = arith.constant 128 : index
    %122 = vector.load %arg6[%c0_43, %c128_44] : memref<8x384xf32, #tpu.memory_space<vmem>>, vector<8x128xf32>
    %c82 = arith.constant 82 : index
    %123 = memref.load %arg1[%c82] : memref<120xf32, #tpu.memory_space<smem>>
    %124 = vector.broadcast %123 : f32 to vector<8x128xf32>
    %125 = arith.mulf %122, %124 : vector<8x128xf32>
    %126 = arith.addf %121, %125 : vector<8x128xf32>
    %c0_45 = arith.constant 0 : index
    %c129_46 = arith.constant 129 : index
    %127 = vector.load %arg6[%c0_45, %c129_46] : memref<8x384xf32, #tpu.memory_space<vmem>>, vector<8x128xf32>
    %c83 = arith.constant 83 : index
    %128 = memref.load %arg1[%c83] : memref<120xf32, #tpu.memory_space<smem>>
    %129 = vector.broadcast %128 : f32 to vector<8x128xf32>
    %130 = arith.mulf %127, %129 : vector<8x128xf32>
    %131 = arith.addf %126, %130 : vector<8x128xf32>
    %c0_47 = arith.constant 0 : index
    %c130_48 = arith.constant 130 : index
    %132 = vector.load %arg6[%c0_47, %c130_48] : memref<8x384xf32, #tpu.memory_space<vmem>>, vector<8x128xf32>
    %c84 = arith.constant 84 : index
    %133 = memref.load %arg1[%c84] : memref<120xf32, #tpu.memory_space<smem>>
    %134 = vector.broadcast %133 : f32 to vector<8x128xf32>
    %135 = arith.mulf %132, %134 : vector<8x128xf32>
    %136 = arith.addf %131, %135 : vector<8x128xf32>
    %c16 = arith.constant 16 : index
    %137 = memref.load %arg2[%c16] : memref<24xf32, #tpu.memory_space<smem>>
    %138 = vector.broadcast %137 : f32 to vector<8x128xf32>
    %139 = arith.addf %136, %138 : vector<8x128xf32>
    %c0_49 = arith.constant 0 : index
    %c128_50 = arith.constant 128 : index
    %140 = vector.load %arg6[%c0_49, %c128_50] : memref<8x384xf32, #tpu.memory_space<vmem>>, vector<8x128xf32>
    tpu.vector_store %arg6[%c0_49, %c128_50], %139 {strides = array<i32>} : memref<8x384xf32, #tpu.memory_space<vmem>>, vector<8x128xf32>,
    %c0_51 = arith.constant 0 : index
    %c126_52 = arith.constant 126 : index
    %141 = vector.load %arg6[%c0_51, %c126_52] : memref<8x384xf32, #tpu.memory_space<vmem>>, vector<8x128xf32>
    %c100 = arith.constant 100 : index
    %142 = memref.load %arg1[%c100] : memref<120xf32, #tpu.memory_space<smem>>
    %143 = vector.broadcast %142 : f32 to vector<8x128xf32>
    %144 = arith.mulf %141, %143 : vector<8x128xf32>
    %c0_53 = arith.constant 0 : index
    %c127_54 = arith.constant 127 : index
    %145 = vector.load %arg6[%c0_53, %c127_54] : memref<8x384xf32, #tpu.memory_space<vmem>>, vector<8x128xf32>
    %c101 = arith.constant 101 : index
    %146 = memref.load %arg1[%c101] : memref<120xf32, #tpu.memory_space<smem>>
    %147 = vector.broadcast %146 : f32 to vector<8x128xf32>
    %148 = arith.mulf %145, %147 : vector<8x128xf32>
    %149 = arith.addf %144, %148 : vector<8x128xf32>
    %c0_55 = arith.constant 0 : index
    %c128_56 = arith.constant 128 : index
    %150 = vector.load %arg6[%c0_55, %c128_56] : memref<8x384xf32, #tpu.memory_space<vmem>>, vector<8x128xf32>
    %c102 = arith.constant 102 : index
    %151 = memref.load %arg1[%c102] : memref<120xf32, #tpu.memory_space<smem>>
    %152 = vector.broadcast %151 : f32 to vector<8x128xf32>
    %153 = arith.mulf %150, %152 : vector<8x128xf32>
    %154 = arith.addf %149, %153 : vector<8x128xf32>
    %c0_57 = arith.constant 0 : index
    %c129_58 = arith.constant 129 : index
    %155 = vector.load %arg6[%c0_57, %c129_58] : memref<8x384xf32, #tpu.memory_space<vmem>>, vector<8x128xf32>
    %c103 = arith.constant 103 : index
    %156 = memref.load %arg1[%c103] : memref<120xf32, #tpu.memory_space<smem>>
    %157 = vector.broadcast %156 : f32 to vector<8x128xf32>
    %158 = arith.mulf %155, %157 : vector<8x128xf32>
    %159 = arith.addf %154, %158 : vector<8x128xf32>
    %c0_59 = arith.constant 0 : index
    %c130_60 = arith.constant 130 : index
    %160 = vector.load %arg6[%c0_59, %c130_60] : memref<8x384xf32, #tpu.memory_space<vmem>>, vector<8x128xf32>
    %c104 = arith.constant 104 : index
    %161 = memref.load %arg1[%c104] : memref<120xf32, #tpu.memory_space<smem>>
    %162 = vector.broadcast %161 : f32 to vector<8x128xf32>
    %163 = arith.mulf %160, %162 : vector<8x128xf32>
    %164 = arith.addf %159, %163 : vector<8x128xf32>
    %c20_61 = arith.constant 20 : index
    %165 = memref.load %arg2[%c20_61] : memref<24xf32, #tpu.memory_space<smem>>
    %166 = vector.broadcast %165 : f32 to vector<8x128xf32>
    %167 = arith.addf %164, %166 : vector<8x128xf32>
    %c0_62 = arith.constant 0 : index
    %c8_63 = arith.constant 8 : index
    %c0_64 = arith.constant 0 : index
    %c0_65 = arith.constant 0 : index
    %168 = vector.load %arg4[%c0_62, %c8_63, %c0_64, %c0_65] : memref<1x12x8x128xf32, #tpu.memory_space<vmem>>, vector<1x1x8x128xf32>
    %169 = vector.shape_cast %168 : vector<1x1x8x128xf32> to vector<8x128xf32>
    %170 = vector.shape_cast %167 : vector<8x128xf32> to vector<1x1x8x128xf32>
    tpu.vector_store %arg4[%c0_62, %c8_63, %c0_64, %c0_65], %170 {strides = array<i32>} : memref<1x12x8x128xf32, #tpu.memory_space<vmem>>, vector<1x1x8x128xf32>,
    %c5 = arith.constant 5 : index
    %171 = memref.load %arg1[%c5] : memref<120xf32, #tpu.memory_space<smem>>
    %172 = vector.broadcast %171 : f32 to vector<8x128xf32>
    %173 = arith.mulf %7, %172 : vector<8x128xf32>
    %c6 = arith.constant 6 : index
    %174 = memref.load %arg1[%c6] : memref<120xf32, #tpu.memory_space<smem>>
    %175 = vector.broadcast %174 : f32 to vector<8x128xf32>
    %176 = arith.mulf %8, %175 : vector<8x128xf32>
    %177 = arith.addf %173, %176 : vector<8x128xf32>
    %c7 = arith.constant 7 : index
    %178 = memref.load %arg1[%c7] : memref<120xf32, #tpu.memory_space<smem>>
    %179 = vector.broadcast %178 : f32 to vector<8x128xf32>
    %180 = arith.mulf %9, %179 : vector<8x128xf32>
    %181 = arith.addf %177, %180 : vector<8x128xf32>
    %c8_66 = arith.constant 8 : index
    %182 = memref.load %arg1[%c8_66] : memref<120xf32, #tpu.memory_space<smem>>
    %183 = vector.broadcast %182 : f32 to vector<8x128xf32>
    %184 = arith.mulf %10, %183 : vector<8x128xf32>
    %185 = arith.addf %181, %184 : vector<8x128xf32>
    %c9 = arith.constant 9 : index
    %186 = memref.load %arg1[%c9] : memref<120xf32, #tpu.memory_space<smem>>
    %187 = vector.broadcast %186 : f32 to vector<8x128xf32>
    %188 = arith.mulf %11, %187 : vector<8x128xf32>
    %189 = arith.addf %185, %188 : vector<8x128xf32>
    %c1_67 = arith.constant 1 : index
    %190 = memref.load %arg2[%c1_67] : memref<24xf32, #tpu.memory_space<smem>>
    %191 = vector.broadcast %190 : f32 to vector<8x128xf32>
    %192 = arith.addf %189, %191 : vector<8x128xf32>
    %c0_68 = arith.constant 0 : index
    %c1_69 = arith.constant 1 : index
    %c0_70 = arith.constant 0 : index
    %c0_71 = arith.constant 0 : index
    %193 = vector.load %arg4[%c0_68, %c1_69, %c0_70, %c0_71] : memref<1x12x8x128xf32, #tpu.memory_space<vmem>>, vector<1x1x8x128xf32>
    %194 = vector.shape_cast %193 : vector<1x1x8x128xf32> to vector<8x128xf32>
    %195 = vector.shape_cast %192 : vector<8x128xf32> to vector<1x1x8x128xf32>
    tpu.vector_store %arg4[%c0_68, %c1_69, %c0_70, %c0_71], %195 {strides = array<i32>} : memref<1x12x8x128xf32, #tpu.memory_space<vmem>>, vector<1x1x8x128xf32>,
    %c25 = arith.constant 25 : index
    %196 = memref.load %arg1[%c25] : memref<120xf32, #tpu.memory_space<smem>>
    %197 = vector.broadcast %196 : f32 to vector<8x128xf32>
    %198 = arith.mulf %7, %197 : vector<8x128xf32>
    %c26 = arith.constant 26 : index
    %199 = memref.load %arg1[%c26] : memref<120xf32, #tpu.memory_space<smem>>
    %200 = vector.broadcast %199 : f32 to vector<8x128xf32>
    %201 = arith.mulf %8, %200 : vector<8x128xf32>
    %202 = arith.addf %198, %201 : vector<8x128xf32>
    %c27 = arith.constant 27 : index
    %203 = memref.load %arg1[%c27] : memref<120xf32, #tpu.memory_space<smem>>
    %204 = vector.broadcast %203 : f32 to vector<8x128xf32>
    %205 = arith.mulf %9, %204 : vector<8x128xf32>
    %206 = arith.addf %202, %205 : vector<8x128xf32>
    %c28 = arith.constant 28 : index
    %207 = memref.load %arg1[%c28] : memref<120xf32, #tpu.memory_space<smem>>
    %208 = vector.broadcast %207 : f32 to vector<8x128xf32>
    %209 = arith.mulf %10, %208 : vector<8x128xf32>
    %210 = arith.addf %206, %209 : vector<8x128xf32>
    %c29 = arith.constant 29 : index
    %211 = memref.load %arg1[%c29] : memref<120xf32, #tpu.memory_space<smem>>
    %212 = vector.broadcast %211 : f32 to vector<8x128xf32>
    %213 = arith.mulf %11, %212 : vector<8x128xf32>
    %214 = arith.addf %210, %213 : vector<8x128xf32>
    %c5_72 = arith.constant 5 : index
    %215 = memref.load %arg2[%c5_72] : memref<24xf32, #tpu.memory_space<smem>>
    %216 = vector.broadcast %215 : f32 to vector<8x128xf32>
    %217 = arith.addf %214, %216 : vector<8x128xf32>
    %c0_73 = arith.constant 0 : index
    %c128_74 = arith.constant 128 : index
    %218 = vector.load %arg6[%c0_73, %c128_74] : memref<8x384xf32, #tpu.memory_space<vmem>>, vector<8x128xf32>
    tpu.vector_store %arg6[%c0_73, %c128_74], %217 {strides = array<i32>} : memref<8x384xf32, #tpu.memory_space<vmem>>, vector<8x128xf32>,
    %c0_75 = arith.constant 0 : index
    %c126_76 = arith.constant 126 : index
    %219 = vector.load %arg6[%c0_75, %c126_76] : memref<8x384xf32, #tpu.memory_space<vmem>>, vector<8x128xf32>
    %c45 = arith.constant 45 : index
    %220 = memref.load %arg1[%c45] : memref<120xf32, #tpu.memory_space<smem>>
    %221 = vector.broadcast %220 : f32 to vector<8x128xf32>
    %222 = arith.mulf %219, %221 : vector<8x128xf32>
    %c0_77 = arith.constant 0 : index
    %c127_78 = arith.constant 127 : index
    %223 = vector.load %arg6[%c0_77, %c127_78] : memref<8x384xf32, #tpu.memory_space<vmem>>, vector<8x128xf32>
    %c46 = arith.constant 46 : index
    %224 = memref.load %arg1[%c46] : memref<120xf32, #tpu.memory_space<smem>>
    %225 = vector.broadcast %224 : f32 to vector<8x128xf32>
    %226 = arith.mulf %223, %225 : vector<8x128xf32>
    %227 = arith.addf %222, %226 : vector<8x128xf32>
    %c0_79 = arith.constant 0 : index
    %c128_80 = arith.constant 128 : index
    %228 = vector.load %arg6[%c0_79, %c128_80] : memref<8x384xf32, #tpu.memory_space<vmem>>, vector<8x128xf32>
    %c47 = arith.constant 47 : index
    %229 = memref.load %arg1[%c47] : memref<120xf32, #tpu.memory_space<smem>>
    %230 = vector.broadcast %229 : f32 to vector<8x128xf32>
    %231 = arith.mulf %228, %230 : vector<8x128xf32>
    %232 = arith.addf %227, %231 : vector<8x128xf32>
    %c0_81 = arith.constant 0 : index
    %c129_82 = arith.constant 129 : index
    %233 = vector.load %arg6[%c0_81, %c129_82] : memref<8x384xf32, #tpu.memory_space<vmem>>, vector<8x128xf32>
    %c48 = arith.constant 48 : index
    %234 = memref.load %arg1[%c48] : memref<120xf32, #tpu.memory_space<smem>>
    %235 = vector.broadcast %234 : f32 to vector<8x128xf32>
    %236 = arith.mulf %233, %235 : vector<8x128xf32>
    %237 = arith.addf %232, %236 : vector<8x128xf32>
    %c0_83 = arith.constant 0 : index
    %c130_84 = arith.constant 130 : index
    %238 = vector.load %arg6[%c0_83, %c130_84] : memref<8x384xf32, #tpu.memory_space<vmem>>, vector<8x128xf32>
    %c49 = arith.constant 49 : index
    %239 = memref.load %arg1[%c49] : memref<120xf32, #tpu.memory_space<smem>>
    %240 = vector.broadcast %239 : f32 to vector<8x128xf32>
    %241 = arith.mulf %238, %240 : vector<8x128xf32>
    %242 = arith.addf %237, %241 : vector<8x128xf32>
    %c9_85 = arith.constant 9 : index
    %243 = memref.load %arg2[%c9_85] : memref<24xf32, #tpu.memory_space<smem>>
    %244 = vector.broadcast %243 : f32 to vector<8x128xf32>
    %245 = arith.addf %242, %244 : vector<8x128xf32>
    %c0_86 = arith.constant 0 : index
    %c5_87 = arith.constant 5 : index
    %c0_88 = arith.constant 0 : index
    %c0_89 = arith.constant 0 : index
    %246 = vector.load %arg4[%c0_86, %c5_87, %c0_88, %c0_89] : memref<1x12x8x128xf32, #tpu.memory_space<vmem>>, vector<1x1x8x128xf32>
    %247 = vector.shape_cast %246 : vector<1x1x8x128xf32> to vector<8x128xf32>
    %248 = vector.shape_cast %245 : vector<8x128xf32> to vector<1x1x8x128xf32>
    tpu.vector_store %arg4[%c0_86, %c5_87, %c0_88, %c0_89], %248 {strides = array<i32>} : memref<1x12x8x128xf32, #tpu.memory_space<vmem>>, vector<1x1x8x128xf32>,
    %c65 = arith.constant 65 : index
    %249 = memref.load %arg1[%c65] : memref<120xf32, #tpu.memory_space<smem>>
    %250 = vector.broadcast %249 : f32 to vector<8x128xf32>
    %251 = arith.mulf %7, %250 : vector<8x128xf32>
    %c66 = arith.constant 66 : index
    %252 = memref.load %arg1[%c66] : memref<120xf32, #tpu.memory_space<smem>>
    %253 = vector.broadcast %252 : f32 to vector<8x128xf32>
    %254 = arith.mulf %8, %253 : vector<8x128xf32>
    %255 = arith.addf %251, %254 : vector<8x128xf32>
    %c67 = arith.constant 67 : index
    %256 = memref.load %arg1[%c67] : memref<120xf32, #tpu.memory_space<smem>>
    %257 = vector.broadcast %256 : f32 to vector<8x128xf32>
    %258 = arith.mulf %9, %257 : vector<8x128xf32>
    %259 = arith.addf %255, %258 : vector<8x128xf32>
    %c68 = arith.constant 68 : index
    %260 = memref.load %arg1[%c68] : memref<120xf32, #tpu.memory_space<smem>>
    %261 = vector.broadcast %260 : f32 to vector<8x128xf32>
    %262 = arith.mulf %10, %261 : vector<8x128xf32>
    %263 = arith.addf %259, %262 : vector<8x128xf32>
    %c69 = arith.constant 69 : index
    %264 = memref.load %arg1[%c69] : memref<120xf32, #tpu.memory_space<smem>>
    %265 = vector.broadcast %264 : f32 to vector<8x128xf32>
    %266 = arith.mulf %11, %265 : vector<8x128xf32>
    %267 = arith.addf %263, %266 : vector<8x128xf32>
    %c13 = arith.constant 13 : index
    %268 = memref.load %arg2[%c13] : memref<24xf32, #tpu.memory_space<smem>>
    %269 = vector.broadcast %268 : f32 to vector<8x128xf32>
    %270 = arith.addf %267, %269 : vector<8x128xf32>
    %c0_90 = arith.constant 0 : index
    %c128_91 = arith.constant 128 : index
    %271 = vector.load %arg6[%c0_90, %c128_91] : memref<8x384xf32, #tpu.memory_space<vmem>>, vector<8x128xf32>
    tpu.vector_store %arg6[%c0_90, %c128_91], %270 {strides = array<i32>} : memref<8x384xf32, #tpu.memory_space<vmem>>, vector<8x128xf32>,
    %c0_92 = arith.constant 0 : index
    %c126_93 = arith.constant 126 : index
    %272 = vector.load %arg6[%c0_92, %c126_93] : memref<8x384xf32, #tpu.memory_space<vmem>>, vector<8x128xf32>
    %c85 = arith.constant 85 : index
    %273 = memref.load %arg1[%c85] : memref<120xf32, #tpu.memory_space<smem>>
    %274 = vector.broadcast %273 : f32 to vector<8x128xf32>
    %275 = arith.mulf %272, %274 : vector<8x128xf32>
    %c0_94 = arith.constant 0 : index
    %c127_95 = arith.constant 127 : index
    %276 = vector.load %arg6[%c0_94, %c127_95] : memref<8x384xf32, #tpu.memory_space<vmem>>, vector<8x128xf32>
    %c86 = arith.constant 86 : index
    %277 = memref.load %arg1[%c86] : memref<120xf32, #tpu.memory_space<smem>>
    %278 = vector.broadcast %277 : f32 to vector<8x128xf32>
    %279 = arith.mulf %276, %278 : vector<8x128xf32>
    %280 = arith.addf %275, %279 : vector<8x128xf32>
    %c0_96 = arith.constant 0 : index
    %c128_97 = arith.constant 128 : index
    %281 = vector.load %arg6[%c0_96, %c128_97] : memref<8x384xf32, #tpu.memory_space<vmem>>, vector<8x128xf32>
    %c87 = arith.constant 87 : index
    %282 = memref.load %arg1[%c87] : memref<120xf32, #tpu.memory_space<smem>>
    %283 = vector.broadcast %282 : f32 to vector<8x128xf32>
    %284 = arith.mulf %281, %283 : vector<8x128xf32>
    %285 = arith.addf %280, %284 : vector<8x128xf32>
    %c0_98 = arith.constant 0 : index
    %c129_99 = arith.constant 129 : index
    %286 = vector.load %arg6[%c0_98, %c129_99] : memref<8x384xf32, #tpu.memory_space<vmem>>, vector<8x128xf32>
    %c88 = arith.constant 88 : index
    %287 = memref.load %arg1[%c88] : memref<120xf32, #tpu.memory_space<smem>>
    %288 = vector.broadcast %287 : f32 to vector<8x128xf32>
    %289 = arith.mulf %286, %288 : vector<8x128xf32>
    %290 = arith.addf %285, %289 : vector<8x128xf32>
    %c0_100 = arith.constant 0 : index
    %c130_101 = arith.constant 130 : index
    %291 = vector.load %arg6[%c0_100, %c130_101] : memref<8x384xf32, #tpu.memory_space<vmem>>, vector<8x128xf32>
    %c89 = arith.constant 89 : index
    %292 = memref.load %arg1[%c89] : memref<120xf32, #tpu.memory_space<smem>>
    %293 = vector.broadcast %292 : f32 to vector<8x128xf32>
    %294 = arith.mulf %291, %293 : vector<8x128xf32>
    %295 = arith.addf %290, %294 : vector<8x128xf32>
    %c17 = arith.constant 17 : index
    %296 = memref.load %arg2[%c17] : memref<24xf32, #tpu.memory_space<smem>>
    %297 = vector.broadcast %296 : f32 to vector<8x128xf32>
    %298 = arith.addf %295, %297 : vector<8x128xf32>
    %c0_102 = arith.constant 0 : index
    %c128_103 = arith.constant 128 : index
    %299 = vector.load %arg6[%c0_102, %c128_103] : memref<8x384xf32, #tpu.memory_space<vmem>>, vector<8x128xf32>
    tpu.vector_store %arg6[%c0_102, %c128_103], %298 {strides = array<i32>} : memref<8x384xf32, #tpu.memory_space<vmem>>, vector<8x128xf32>,
    %c0_104 = arith.constant 0 : index
    %c126_105 = arith.constant 126 : index
    %300 = vector.load %arg6[%c0_104, %c126_105] : memref<8x384xf32, #tpu.memory_space<vmem>>, vector<8x128xf32>
    %c105 = arith.constant 105 : index
    %301 = memref.load %arg1[%c105] : memref<120xf32, #tpu.memory_space<smem>>
    %302 = vector.broadcast %301 : f32 to vector<8x128xf32>
    %303 = arith.mulf %300, %302 : vector<8x128xf32>
    %c0_106 = arith.constant 0 : index
    %c127_107 = arith.constant 127 : index
    %304 = vector.load %arg6[%c0_106, %c127_107] : memref<8x384xf32, #tpu.memory_space<vmem>>, vector<8x128xf32>
    %c106 = arith.constant 106 : index
    %305 = memref.load %arg1[%c106] : memref<120xf32, #tpu.memory_space<smem>>
    %306 = vector.broadcast %305 : f32 to vector<8x128xf32>
    %307 = arith.mulf %304, %306 : vector<8x128xf32>
    %308 = arith.addf %303, %307 : vector<8x128xf32>
    %c0_108 = arith.constant 0 : index
    %c128_109 = arith.constant 128 : index
    %309 = vector.load %arg6[%c0_108, %c128_109] : memref<8x384xf32, #tpu.memory_space<vmem>>, vector<8x128xf32>
    %c107 = arith.constant 107 : index
    %310 = memref.load %arg1[%c107] : memref<120xf32, #tpu.memory_space<smem>>
    %311 = vector.broadcast %310 : f32 to vector<8x128xf32>
    %312 = arith.mulf %309, %311 : vector<8x128xf32>
    %313 = arith.addf %308, %312 : vector<8x128xf32>
    %c0_110 = arith.constant 0 : index
    %c129_111 = arith.constant 129 : index
    %314 = vector.load %arg6[%c0_110, %c129_111] : memref<8x384xf32, #tpu.memory_space<vmem>>, vector<8x128xf32>
    %c108 = arith.constant 108 : index
    %315 = memref.load %arg1[%c108] : memref<120xf32, #tpu.memory_space<smem>>
    %316 = vector.broadcast %315 : f32 to vector<8x128xf32>
    %317 = arith.mulf %314, %316 : vector<8x128xf32>
    %318 = arith.addf %313, %317 : vector<8x128xf32>
    %c0_112 = arith.constant 0 : index
    %c130_113 = arith.constant 130 : index
    %319 = vector.load %arg6[%c0_112, %c130_113] : memref<8x384xf32, #tpu.memory_space<vmem>>, vector<8x128xf32>
    %c109 = arith.constant 109 : index
    %320 = memref.load %arg1[%c109] : memref<120xf32, #tpu.memory_space<smem>>
    %321 = vector.broadcast %320 : f32 to vector<8x128xf32>
    %322 = arith.mulf %319, %321 : vector<8x128xf32>
    %323 = arith.addf %318, %322 : vector<8x128xf32>
    %c21_114 = arith.constant 21 : index
    %324 = memref.load %arg2[%c21_114] : memref<24xf32, #tpu.memory_space<smem>>
    %325 = vector.broadcast %324 : f32 to vector<8x128xf32>
    %326 = arith.addf %323, %325 : vector<8x128xf32>
    %c0_115 = arith.constant 0 : index
    %c9_116 = arith.constant 9 : index
    %c0_117 = arith.constant 0 : index
    %c0_118 = arith.constant 0 : index
    %327 = vector.load %arg4[%c0_115, %c9_116, %c0_117, %c0_118] : memref<1x12x8x128xf32, #tpu.memory_space<vmem>>, vector<1x1x8x128xf32>
    %328 = vector.shape_cast %327 : vector<1x1x8x128xf32> to vector<8x128xf32>
    %329 = vector.shape_cast %326 : vector<8x128xf32> to vector<1x1x8x128xf32>
    tpu.vector_store %arg4[%c0_115, %c9_116, %c0_117, %c0_118], %329 {strides = array<i32>} : memref<1x12x8x128xf32, #tpu.memory_space<vmem>>, vector<1x1x8x128xf32>,
    %c10 = arith.constant 10 : index
    %330 = memref.load %arg1[%c10] : memref<120xf32, #tpu.memory_space<smem>>
    %331 = vector.broadcast %330 : f32 to vector<8x128xf32>
    %332 = arith.mulf %7, %331 : vector<8x128xf32>
    %c11 = arith.constant 11 : index
    %333 = memref.load %arg1[%c11] : memref<120xf32, #tpu.memory_space<smem>>
    %334 = vector.broadcast %333 : f32 to vector<8x128xf32>
    %335 = arith.mulf %8, %334 : vector<8x128xf32>
    %336 = arith.addf %332, %335 : vector<8x128xf32>
    %c12_119 = arith.constant 12 : index
    %337 = memref.load %arg1[%c12_119] : memref<120xf32, #tpu.memory_space<smem>>
    %338 = vector.broadcast %337 : f32 to vector<8x128xf32>
    %339 = arith.mulf %9, %338 : vector<8x128xf32>
    %340 = arith.addf %336, %339 : vector<8x128xf32>
    %c13_120 = arith.constant 13 : index
    %341 = memref.load %arg1[%c13_120] : memref<120xf32, #tpu.memory_space<smem>>
    %342 = vector.broadcast %341 : f32 to vector<8x128xf32>
    %343 = arith.mulf %10, %342 : vector<8x128xf32>
    %344 = arith.addf %340, %343 : vector<8x128xf32>
    %c14 = arith.constant 14 : index
    %345 = memref.load %arg1[%c14] : memref<120xf32, #tpu.memory_space<smem>>
    %346 = vector.broadcast %345 : f32 to vector<8x128xf32>
    %347 = arith.mulf %11, %346 : vector<8x128xf32>
    %348 = arith.addf %344, %347 : vector<8x128xf32>
    %c2_121 = arith.constant 2 : index
    %349 = memref.load %arg2[%c2_121] : memref<24xf32, #tpu.memory_space<smem>>
    %350 = vector.broadcast %349 : f32 to vector<8x128xf32>
    %351 = arith.addf %348, %350 : vector<8x128xf32>
    %c0_122 = arith.constant 0 : index
    %c2_123 = arith.constant 2 : index
    %c0_124 = arith.constant 0 : index
    %c0_125 = arith.constant 0 : index
    %352 = vector.load %arg4[%c0_122, %c2_123, %c0_124, %c0_125] : memref<1x12x8x128xf32, #tpu.memory_space<vmem>>, vector<1x1x8x128xf32>
    %353 = vector.shape_cast %352 : vector<1x1x8x128xf32> to vector<8x128xf32>
    %354 = vector.shape_cast %351 : vector<8x128xf32> to vector<1x1x8x128xf32>
    tpu.vector_store %arg4[%c0_122, %c2_123, %c0_124, %c0_125], %354 {strides = array<i32>} : memref<1x12x8x128xf32, #tpu.memory_space<vmem>>, vector<1x1x8x128xf32>,
    %c30 = arith.constant 30 : index
    %355 = memref.load %arg1[%c30] : memref<120xf32, #tpu.memory_space<smem>>
    %356 = vector.broadcast %355 : f32 to vector<8x128xf32>
    %357 = arith.mulf %7, %356 : vector<8x128xf32>
    %c31 = arith.constant 31 : index
    %358 = memref.load %arg1[%c31] : memref<120xf32, #tpu.memory_space<smem>>
    %359 = vector.broadcast %358 : f32 to vector<8x128xf32>
    %360 = arith.mulf %8, %359 : vector<8x128xf32>
    %361 = arith.addf %357, %360 : vector<8x128xf32>
    %c32 = arith.constant 32 : index
    %362 = memref.load %arg1[%c32] : memref<120xf32, #tpu.memory_space<smem>>
    %363 = vector.broadcast %362 : f32 to vector<8x128xf32>
    %364 = arith.mulf %9, %363 : vector<8x128xf32>
    %365 = arith.addf %361, %364 : vector<8x128xf32>
    %c33 = arith.constant 33 : index
    %366 = memref.load %arg1[%c33] : memref<120xf32, #tpu.memory_space<smem>>
    %367 = vector.broadcast %366 : f32 to vector<8x128xf32>
    %368 = arith.mulf %10, %367 : vector<8x128xf32>
    %369 = arith.addf %365, %368 : vector<8x128xf32>
    %c34 = arith.constant 34 : index
    %370 = memref.load %arg1[%c34] : memref<120xf32, #tpu.memory_space<smem>>
    %371 = vector.broadcast %370 : f32 to vector<8x128xf32>
    %372 = arith.mulf %11, %371 : vector<8x128xf32>
    %373 = arith.addf %369, %372 : vector<8x128xf32>
    %c6_126 = arith.constant 6 : index
    %374 = memref.load %arg2[%c6_126] : memref<24xf32, #tpu.memory_space<smem>>
    %375 = vector.broadcast %374 : f32 to vector<8x128xf32>
    %376 = arith.addf %373, %375 : vector<8x128xf32>
    %c0_127 = arith.constant 0 : index
    %c128_128 = arith.constant 128 : index
    %377 = vector.load %arg6[%c0_127, %c128_128] : memref<8x384xf32, #tpu.memory_space<vmem>>, vector<8x128xf32>
    tpu.vector_store %arg6[%c0_127, %c128_128], %376 {strides = array<i32>} : memref<8x384xf32, #tpu.memory_space<vmem>>, vector<8x128xf32>,
    %c0_129 = arith.constant 0 : index
    %c126_130 = arith.constant 126 : index
    %378 = vector.load %arg6[%c0_129, %c126_130] : memref<8x384xf32, #tpu.memory_space<vmem>>, vector<8x128xf32>
    %c50 = arith.constant 50 : index
    %379 = memref.load %arg1[%c50] : memref<120xf32, #tpu.memory_space<smem>>
    %380 = vector.broadcast %379 : f32 to vector<8x128xf32>
    %381 = arith.mulf %378, %380 : vector<8x128xf32>
    %c0_131 = arith.constant 0 : index
    %c127_132 = arith.constant 127 : index
    %382 = vector.load %arg6[%c0_131, %c127_132] : memref<8x384xf32, #tpu.memory_space<vmem>>, vector<8x128xf32>
    %c51 = arith.constant 51 : index
    %383 = memref.load %arg1[%c51] : memref<120xf32, #tpu.memory_space<smem>>
    %384 = vector.broadcast %383 : f32 to vector<8x128xf32>
    %385 = arith.mulf %382, %384 : vector<8x128xf32>
    %386 = arith.addf %381, %385 : vector<8x128xf32>
    %c0_133 = arith.constant 0 : index
    %c128_134 = arith.constant 128 : index
    %387 = vector.load %arg6[%c0_133, %c128_134] : memref<8x384xf32, #tpu.memory_space<vmem>>, vector<8x128xf32>
    %c52 = arith.constant 52 : index
    %388 = memref.load %arg1[%c52] : memref<120xf32, #tpu.memory_space<smem>>
    %389 = vector.broadcast %388 : f32 to vector<8x128xf32>
    %390 = arith.mulf %387, %389 : vector<8x128xf32>
    %391 = arith.addf %386, %390 : vector<8x128xf32>
    %c0_135 = arith.constant 0 : index
    %c129_136 = arith.constant 129 : index
    %392 = vector.load %arg6[%c0_135, %c129_136] : memref<8x384xf32, #tpu.memory_space<vmem>>, vector<8x128xf32>
    %c53 = arith.constant 53 : index
    %393 = memref.load %arg1[%c53] : memref<120xf32, #tpu.memory_space<smem>>
    %394 = vector.broadcast %393 : f32 to vector<8x128xf32>
    %395 = arith.mulf %392, %394 : vector<8x128xf32>
    %396 = arith.addf %391, %395 : vector<8x128xf32>
    %c0_137 = arith.constant 0 : index
    %c130_138 = arith.constant 130 : index
    %397 = vector.load %arg6[%c0_137, %c130_138] : memref<8x384xf32, #tpu.memory_space<vmem>>, vector<8x128xf32>
    %c54 = arith.constant 54 : index
    %398 = memref.load %arg1[%c54] : memref<120xf32, #tpu.memory_space<smem>>
    %399 = vector.broadcast %398 : f32 to vector<8x128xf32>
    %400 = arith.mulf %397, %399 : vector<8x128xf32>
    %401 = arith.addf %396, %400 : vector<8x128xf32>
    %c10_139 = arith.constant 10 : index
    %402 = memref.load %arg2[%c10_139] : memref<24xf32, #tpu.memory_space<smem>>
    %403 = vector.broadcast %402 : f32 to vector<8x128xf32>
    %404 = arith.addf %401, %403 : vector<8x128xf32>
    %c0_140 = arith.constant 0 : index
    %c6_141 = arith.constant 6 : index
    %c0_142 = arith.constant 0 : index
    %c0_143 = arith.constant 0 : index
    %405 = vector.load %arg4[%c0_140, %c6_141, %c0_142, %c0_143] : memref<1x12x8x128xf32, #tpu.memory_space<vmem>>, vector<1x1x8x128xf32>
    %406 = vector.shape_cast %405 : vector<1x1x8x128xf32> to vector<8x128xf32>
    %407 = vector.shape_cast %404 : vector<8x128xf32> to vector<1x1x8x128xf32>
    tpu.vector_store %arg4[%c0_140, %c6_141, %c0_142, %c0_143], %407 {strides = array<i32>} : memref<1x12x8x128xf32, #tpu.memory_space<vmem>>, vector<1x1x8x128xf32>,
    %c70 = arith.constant 70 : index
    %408 = memref.load %arg1[%c70] : memref<120xf32, #tpu.memory_space<smem>>
    %409 = vector.broadcast %408 : f32 to vector<8x128xf32>
    %410 = arith.mulf %7, %409 : vector<8x128xf32>
    %c71 = arith.constant 71 : index
    %411 = memref.load %arg1[%c71] : memref<120xf32, #tpu.memory_space<smem>>
    %412 = vector.broadcast %411 : f32 to vector<8x128xf32>
    %413 = arith.mulf %8, %412 : vector<8x128xf32>
    %414 = arith.addf %410, %413 : vector<8x128xf32>
    %c72 = arith.constant 72 : index
    %415 = memref.load %arg1[%c72] : memref<120xf32, #tpu.memory_space<smem>>
    %416 = vector.broadcast %415 : f32 to vector<8x128xf32>
    %417 = arith.mulf %9, %416 : vector<8x128xf32>
    %418 = arith.addf %414, %417 : vector<8x128xf32>
    %c73 = arith.constant 73 : index
    %419 = memref.load %arg1[%c73] : memref<120xf32, #tpu.memory_space<smem>>
    %420 = vector.broadcast %419 : f32 to vector<8x128xf32>
    %421 = arith.mulf %10, %420 : vector<8x128xf32>
    %422 = arith.addf %418, %421 : vector<8x128xf32>
    %c74 = arith.constant 74 : index
    %423 = memref.load %arg1[%c74] : memref<120xf32, #tpu.memory_space<smem>>
    %424 = vector.broadcast %423 : f32 to vector<8x128xf32>
    %425 = arith.mulf %11, %424 : vector<8x128xf32>
    %426 = arith.addf %422, %425 : vector<8x128xf32>
    %c14_144 = arith.constant 14 : index
    %427 = memref.load %arg2[%c14_144] : memref<24xf32, #tpu.memory_space<smem>>
    %428 = vector.broadcast %427 : f32 to vector<8x128xf32>
    %429 = arith.addf %426, %428 : vector<8x128xf32>
    %c0_145 = arith.constant 0 : index
    %c128_146 = arith.constant 128 : index
    %430 = vector.load %arg6[%c0_145, %c128_146] : memref<8x384xf32, #tpu.memory_space<vmem>>, vector<8x128xf32>
    tpu.vector_store %arg6[%c0_145, %c128_146], %429 {strides = array<i32>} : memref<8x384xf32, #tpu.memory_space<vmem>>, vector<8x128xf32>,
    %c0_147 = arith.constant 0 : index
    %c126_148 = arith.constant 126 : index
    %431 = vector.load %arg6[%c0_147, %c126_148] : memref<8x384xf32, #tpu.memory_space<vmem>>, vector<8x128xf32>
    %c90 = arith.constant 90 : index
    %432 = memref.load %arg1[%c90] : memref<120xf32, #tpu.memory_space<smem>>
    %433 = vector.broadcast %432 : f32 to vector<8x128xf32>
    %434 = arith.mulf %431, %433 : vector<8x128xf32>
    %c0_149 = arith.constant 0 : index
    %c127_150 = arith.constant 127 : index
    %435 = vector.load %arg6[%c0_149, %c127_150] : memref<8x384xf32, #tpu.memory_space<vmem>>, vector<8x128xf32>
    %c91 = arith.constant 91 : index
    %436 = memref.load %arg1[%c91] : memref<120xf32, #tpu.memory_space<smem>>
    %437 = vector.broadcast %436 : f32 to vector<8x128xf32>
    %438 = arith.mulf %435, %437 : vector<8x128xf32>
    %439 = arith.addf %434, %438 : vector<8x128xf32>
    %c0_151 = arith.constant 0 : index
    %c128_152 = arith.constant 128 : index
    %440 = vector.load %arg6[%c0_151, %c128_152] : memref<8x384xf32, #tpu.memory_space<vmem>>, vector<8x128xf32>
    %c92 = arith.constant 92 : index
    %441 = memref.load %arg1[%c92] : memref<120xf32, #tpu.memory_space<smem>>
    %442 = vector.broadcast %441 : f32 to vector<8x128xf32>
    %443 = arith.mulf %440, %442 : vector<8x128xf32>
    %444 = arith.addf %439, %443 : vector<8x128xf32>
    %c0_153 = arith.constant 0 : index
    %c129_154 = arith.constant 129 : index
    %445 = vector.load %arg6[%c0_153, %c129_154] : memref<8x384xf32, #tpu.memory_space<vmem>>, vector<8x128xf32>
    %c93 = arith.constant 93 : index
    %446 = memref.load %arg1[%c93] : memref<120xf32, #tpu.memory_space<smem>>
    %447 = vector.broadcast %446 : f32 to vector<8x128xf32>
    %448 = arith.mulf %445, %447 : vector<8x128xf32>
    %449 = arith.addf %444, %448 : vector<8x128xf32>
    %c0_155 = arith.constant 0 : index
    %c130_156 = arith.constant 130 : index
    %450 = vector.load %arg6[%c0_155, %c130_156] : memref<8x384xf32, #tpu.memory_space<vmem>>, vector<8x128xf32>
    %c94 = arith.constant 94 : index
    %451 = memref.load %arg1[%c94] : memref<120xf32, #tpu.memory_space<smem>>
    %452 = vector.broadcast %451 : f32 to vector<8x128xf32>
    %453 = arith.mulf %450, %452 : vector<8x128xf32>
    %454 = arith.addf %449, %453 : vector<8x128xf32>
    %c18 = arith.constant 18 : index
    %455 = memref.load %arg2[%c18] : memref<24xf32, #tpu.memory_space<smem>>
    %456 = vector.broadcast %455 : f32 to vector<8x128xf32>
    %457 = arith.addf %454, %456 : vector<8x128xf32>
    %c0_157 = arith.constant 0 : index
    %c128_158 = arith.constant 128 : index
    %458 = vector.load %arg6[%c0_157, %c128_158] : memref<8x384xf32, #tpu.memory_space<vmem>>, vector<8x128xf32>
    tpu.vector_store %arg6[%c0_157, %c128_158], %457 {strides = array<i32>} : memref<8x384xf32, #tpu.memory_space<vmem>>, vector<8x128xf32>,
    %c0_159 = arith.constant 0 : index
    %c126_160 = arith.constant 126 : index
    %459 = vector.load %arg6[%c0_159, %c126_160] : memref<8x384xf32, #tpu.memory_space<vmem>>, vector<8x128xf32>
    %c110 = arith.constant 110 : index
    %460 = memref.load %arg1[%c110] : memref<120xf32, #tpu.memory_space<smem>>
    %461 = vector.broadcast %460 : f32 to vector<8x128xf32>
    %462 = arith.mulf %459, %461 : vector<8x128xf32>
    %c0_161 = arith.constant 0 : index
    %c127_162 = arith.constant 127 : index
    %463 = vector.load %arg6[%c0_161, %c127_162] : memref<8x384xf32, #tpu.memory_space<vmem>>, vector<8x128xf32>
    %c111 = arith.constant 111 : index
    %464 = memref.load %arg1[%c111] : memref<120xf32, #tpu.memory_space<smem>>
    %465 = vector.broadcast %464 : f32 to vector<8x128xf32>
    %466 = arith.mulf %463, %465 : vector<8x128xf32>
    %467 = arith.addf %462, %466 : vector<8x128xf32>
    %c0_163 = arith.constant 0 : index
    %c128_164 = arith.constant 128 : index
    %468 = vector.load %arg6[%c0_163, %c128_164] : memref<8x384xf32, #tpu.memory_space<vmem>>, vector<8x128xf32>
    %c112 = arith.constant 112 : index
    %469 = memref.load %arg1[%c112] : memref<120xf32, #tpu.memory_space<smem>>
    %470 = vector.broadcast %469 : f32 to vector<8x128xf32>
    %471 = arith.mulf %468, %470 : vector<8x128xf32>
    %472 = arith.addf %467, %471 : vector<8x128xf32>
    %c0_165 = arith.constant 0 : index
    %c129_166 = arith.constant 129 : index
    %473 = vector.load %arg6[%c0_165, %c129_166] : memref<8x384xf32, #tpu.memory_space<vmem>>, vector<8x128xf32>
    %c113 = arith.constant 113 : index
    %474 = memref.load %arg1[%c113] : memref<120xf32, #tpu.memory_space<smem>>
    %475 = vector.broadcast %474 : f32 to vector<8x128xf32>
    %476 = arith.mulf %473, %475 : vector<8x128xf32>
    %477 = arith.addf %472, %476 : vector<8x128xf32>
    %c0_167 = arith.constant 0 : index
    %c130_168 = arith.constant 130 : index
    %478 = vector.load %arg6[%c0_167, %c130_168] : memref<8x384xf32, #tpu.memory_space<vmem>>, vector<8x128xf32>
    %c114 = arith.constant 114 : index
    %479 = memref.load %arg1[%c114] : memref<120xf32, #tpu.memory_space<smem>>
    %480 = vector.broadcast %479 : f32 to vector<8x128xf32>
    %481 = arith.mulf %478, %480 : vector<8x128xf32>
    %482 = arith.addf %477, %481 : vector<8x128xf32>
    %c22_169 = arith.constant 22 : index
    %483 = memref.load %arg2[%c22_169] : memref<24xf32, #tpu.memory_space<smem>>
    %484 = vector.broadcast %483 : f32 to vector<8x128xf32>
    %485 = arith.addf %482, %484 : vector<8x128xf32>
    %c0_170 = arith.constant 0 : index
    %c10_171 = arith.constant 10 : index
    %c0_172 = arith.constant 0 : index
    %c0_173 = arith.constant 0 : index
    %486 = vector.load %arg4[%c0_170, %c10_171, %c0_172, %c0_173] : memref<1x12x8x128xf32, #tpu.memory_space<vmem>>, vector<1x1x8x128xf32>
    %487 = vector.shape_cast %486 : vector<1x1x8x128xf32> to vector<8x128xf32>
    %488 = vector.shape_cast %485 : vector<8x128xf32> to vector<1x1x8x128xf32>
    tpu.vector_store %arg4[%c0_170, %c10_171, %c0_172, %c0_173], %488 {strides = array<i32>} : memref<1x12x8x128xf32, #tpu.memory_space<vmem>>, vector<1x1x8x128xf32>,
    %c15 = arith.constant 15 : index
    %489 = memref.load %arg1[%c15] : memref<120xf32, #tpu.memory_space<smem>>
    %490 = vector.broadcast %489 : f32 to vector<8x128xf32>
    %491 = arith.mulf %7, %490 : vector<8x128xf32>
    %c16_174 = arith.constant 16 : index
    %492 = memref.load %arg1[%c16_174] : memref<120xf32, #tpu.memory_space<smem>>
    %493 = vector.broadcast %492 : f32 to vector<8x128xf32>
    %494 = arith.mulf %8, %493 : vector<8x128xf32>
    %495 = arith.addf %491, %494 : vector<8x128xf32>
    %c17_175 = arith.constant 17 : index
    %496 = memref.load %arg1[%c17_175] : memref<120xf32, #tpu.memory_space<smem>>
    %497 = vector.broadcast %496 : f32 to vector<8x128xf32>
    %498 = arith.mulf %9, %497 : vector<8x128xf32>
    %499 = arith.addf %495, %498 : vector<8x128xf32>
    %c18_176 = arith.constant 18 : index
    %500 = memref.load %arg1[%c18_176] : memref<120xf32, #tpu.memory_space<smem>>
    %501 = vector.broadcast %500 : f32 to vector<8x128xf32>
    %502 = arith.mulf %10, %501 : vector<8x128xf32>
    %503 = arith.addf %499, %502 : vector<8x128xf32>
    %c19 = arith.constant 19 : index
    %504 = memref.load %arg1[%c19] : memref<120xf32, #tpu.memory_space<smem>>
    %505 = vector.broadcast %504 : f32 to vector<8x128xf32>
    %506 = arith.mulf %11, %505 : vector<8x128xf32>
    %507 = arith.addf %503, %506 : vector<8x128xf32>
    %c3_177 = arith.constant 3 : index
    %508 = memref.load %arg2[%c3_177] : memref<24xf32, #tpu.memory_space<smem>>
    %509 = vector.broadcast %508 : f32 to vector<8x128xf32>
    %510 = arith.addf %507, %509 : vector<8x128xf32>
    %c0_178 = arith.constant 0 : index
    %c3_179 = arith.constant 3 : index
    %c0_180 = arith.constant 0 : index
    %c0_181 = arith.constant 0 : index
    %511 = vector.load %arg4[%c0_178, %c3_179, %c0_180, %c0_181] : memref<1x12x8x128xf32, #tpu.memory_space<vmem>>, vector<1x1x8x128xf32>
    %512 = vector.shape_cast %511 : vector<1x1x8x128xf32> to vector<8x128xf32>
    %513 = vector.shape_cast %510 : vector<8x128xf32> to vector<1x1x8x128xf32>
    tpu.vector_store %arg4[%c0_178, %c3_179, %c0_180, %c0_181], %513 {strides = array<i32>} : memref<1x12x8x128xf32, #tpu.memory_space<vmem>>, vector<1x1x8x128xf32>,
    %c35 = arith.constant 35 : index
    %514 = memref.load %arg1[%c35] : memref<120xf32, #tpu.memory_space<smem>>
    %515 = vector.broadcast %514 : f32 to vector<8x128xf32>
    %516 = arith.mulf %7, %515 : vector<8x128xf32>
    %c36 = arith.constant 36 : index
    %517 = memref.load %arg1[%c36] : memref<120xf32, #tpu.memory_space<smem>>
    %518 = vector.broadcast %517 : f32 to vector<8x128xf32>
    %519 = arith.mulf %8, %518 : vector<8x128xf32>
    %520 = arith.addf %516, %519 : vector<8x128xf32>
    %c37 = arith.constant 37 : index
    %521 = memref.load %arg1[%c37] : memref<120xf32, #tpu.memory_space<smem>>
    %522 = vector.broadcast %521 : f32 to vector<8x128xf32>
    %523 = arith.mulf %9, %522 : vector<8x128xf32>
    %524 = arith.addf %520, %523 : vector<8x128xf32>
    %c38 = arith.constant 38 : index
    %525 = memref.load %arg1[%c38] : memref<120xf32, #tpu.memory_space<smem>>
    %526 = vector.broadcast %525 : f32 to vector<8x128xf32>
    %527 = arith.mulf %10, %526 : vector<8x128xf32>
    %528 = arith.addf %524, %527 : vector<8x128xf32>
    %c39 = arith.constant 39 : index
    %529 = memref.load %arg1[%c39] : memref<120xf32, #tpu.memory_space<smem>>
    %530 = vector.broadcast %529 : f32 to vector<8x128xf32>
    %531 = arith.mulf %11, %530 : vector<8x128xf32>
    %532 = arith.addf %528, %531 : vector<8x128xf32>
    %c7_182 = arith.constant 7 : index
    %533 = memref.load %arg2[%c7_182] : memref<24xf32, #tpu.memory_space<smem>>
    %534 = vector.broadcast %533 : f32 to vector<8x128xf32>
    %535 = arith.addf %532, %534 : vector<8x128xf32>
    %c0_183 = arith.constant 0 : index
    %c128_184 = arith.constant 128 : index
    %536 = vector.load %arg6[%c0_183, %c128_184] : memref<8x384xf32, #tpu.memory_space<vmem>>, vector<8x128xf32>
    tpu.vector_store %arg6[%c0_183, %c128_184], %535 {strides = array<i32>} : memref<8x384xf32, #tpu.memory_space<vmem>>, vector<8x128xf32>,
    %c0_185 = arith.constant 0 : index
    %c126_186 = arith.constant 126 : index
    %537 = vector.load %arg6[%c0_185, %c126_186] : memref<8x384xf32, #tpu.memory_space<vmem>>, vector<8x128xf32>
    %c55 = arith.constant 55 : index
    %538 = memref.load %arg1[%c55] : memref<120xf32, #tpu.memory_space<smem>>
    %539 = vector.broadcast %538 : f32 to vector<8x128xf32>
    %540 = arith.mulf %537, %539 : vector<8x128xf32>
    %c0_187 = arith.constant 0 : index
    %c127_188 = arith.constant 127 : index
    %541 = vector.load %arg6[%c0_187, %c127_188] : memref<8x384xf32, #tpu.memory_space<vmem>>, vector<8x128xf32>
    %c56 = arith.constant 56 : index
    %542 = memref.load %arg1[%c56] : memref<120xf32, #tpu.memory_space<smem>>
    %543 = vector.broadcast %542 : f32 to vector<8x128xf32>
    %544 = arith.mulf %541, %543 : vector<8x128xf32>
    %545 = arith.addf %540, %544 : vector<8x128xf32>
    %c0_189 = arith.constant 0 : index
    %c128_190 = arith.constant 128 : index
    %546 = vector.load %arg6[%c0_189, %c128_190] : memref<8x384xf32, #tpu.memory_space<vmem>>, vector<8x128xf32>
    %c57 = arith.constant 57 : index
    %547 = memref.load %arg1[%c57] : memref<120xf32, #tpu.memory_space<smem>>
    %548 = vector.broadcast %547 : f32 to vector<8x128xf32>
    %549 = arith.mulf %546, %548 : vector<8x128xf32>
    %550 = arith.addf %545, %549 : vector<8x128xf32>
    %c0_191 = arith.constant 0 : index
    %c129_192 = arith.constant 129 : index
    %551 = vector.load %arg6[%c0_191, %c129_192] : memref<8x384xf32, #tpu.memory_space<vmem>>, vector<8x128xf32>
    %c58 = arith.constant 58 : index
    %552 = memref.load %arg1[%c58] : memref<120xf32, #tpu.memory_space<smem>>
    %553 = vector.broadcast %552 : f32 to vector<8x128xf32>
    %554 = arith.mulf %551, %553 : vector<8x128xf32>
    %555 = arith.addf %550, %554 : vector<8x128xf32>
    %c0_193 = arith.constant 0 : index
    %c130_194 = arith.constant 130 : index
    %556 = vector.load %arg6[%c0_193, %c130_194] : memref<8x384xf32, #tpu.memory_space<vmem>>, vector<8x128xf32>
    %c59 = arith.constant 59 : index
    %557 = memref.load %arg1[%c59] : memref<120xf32, #tpu.memory_space<smem>>
    %558 = vector.broadcast %557 : f32 to vector<8x128xf32>
    %559 = arith.mulf %556, %558 : vector<8x128xf32>
    %560 = arith.addf %555, %559 : vector<8x128xf32>
    %c11_195 = arith.constant 11 : index
    %561 = memref.load %arg2[%c11_195] : memref<24xf32, #tpu.memory_space<smem>>
    %562 = vector.broadcast %561 : f32 to vector<8x128xf32>
    %563 = arith.addf %560, %562 : vector<8x128xf32>
    %c0_196 = arith.constant 0 : index
    %c7_197 = arith.constant 7 : index
    %c0_198 = arith.constant 0 : index
    %c0_199 = arith.constant 0 : index
    %564 = vector.load %arg4[%c0_196, %c7_197, %c0_198, %c0_199] : memref<1x12x8x128xf32, #tpu.memory_space<vmem>>, vector<1x1x8x128xf32>
    %565 = vector.shape_cast %564 : vector<1x1x8x128xf32> to vector<8x128xf32>
    %566 = vector.shape_cast %563 : vector<8x128xf32> to vector<1x1x8x128xf32>
    tpu.vector_store %arg4[%c0_196, %c7_197, %c0_198, %c0_199], %566 {strides = array<i32>} : memref<1x12x8x128xf32, #tpu.memory_space<vmem>>, vector<1x1x8x128xf32>,
    %c75 = arith.constant 75 : index
    %567 = memref.load %arg1[%c75] : memref<120xf32, #tpu.memory_space<smem>>
    %568 = vector.broadcast %567 : f32 to vector<8x128xf32>
    %569 = arith.mulf %7, %568 : vector<8x128xf32>
    %c76 = arith.constant 76 : index
    %570 = memref.load %arg1[%c76] : memref<120xf32, #tpu.memory_space<smem>>
    %571 = vector.broadcast %570 : f32 to vector<8x128xf32>
    %572 = arith.mulf %8, %571 : vector<8x128xf32>
    %573 = arith.addf %569, %572 : vector<8x128xf32>
    %c77 = arith.constant 77 : index
    %574 = memref.load %arg1[%c77] : memref<120xf32, #tpu.memory_space<smem>>
    %575 = vector.broadcast %574 : f32 to vector<8x128xf32>
    %576 = arith.mulf %9, %575 : vector<8x128xf32>
    %577 = arith.addf %573, %576 : vector<8x128xf32>
    %c78 = arith.constant 78 : index
    %578 = memref.load %arg1[%c78] : memref<120xf32, #tpu.memory_space<smem>>
    %579 = vector.broadcast %578 : f32 to vector<8x128xf32>
    %580 = arith.mulf %10, %579 : vector<8x128xf32>
    %581 = arith.addf %577, %580 : vector<8x128xf32>
    %c79 = arith.constant 79 : index
    %582 = memref.load %arg1[%c79] : memref<120xf32, #tpu.memory_space<smem>>
    %583 = vector.broadcast %582 : f32 to vector<8x128xf32>
    %584 = arith.mulf %11, %583 : vector<8x128xf32>
    %585 = arith.addf %581, %584 : vector<8x128xf32>
    %c15_200 = arith.constant 15 : index
    %586 = memref.load %arg2[%c15_200] : memref<24xf32, #tpu.memory_space<smem>>
    %587 = vector.broadcast %586 : f32 to vector<8x128xf32>
    %588 = arith.addf %585, %587 : vector<8x128xf32>
    %c0_201 = arith.constant 0 : index
    %c128_202 = arith.constant 128 : index
    %589 = vector.load %arg6[%c0_201, %c128_202] : memref<8x384xf32, #tpu.memory_space<vmem>>, vector<8x128xf32>
    tpu.vector_store %arg6[%c0_201, %c128_202], %588 {strides = array<i32>} : memref<8x384xf32, #tpu.memory_space<vmem>>, vector<8x128xf32>,
    %c0_203 = arith.constant 0 : index
    %c126_204 = arith.constant 126 : index
    %590 = vector.load %arg6[%c0_203, %c126_204] : memref<8x384xf32, #tpu.memory_space<vmem>>, vector<8x128xf32>
    %c95 = arith.constant 95 : index
    %591 = memref.load %arg1[%c95] : memref<120xf32, #tpu.memory_space<smem>>
    %592 = vector.broadcast %591 : f32 to vector<8x128xf32>
    %593 = arith.mulf %590, %592 : vector<8x128xf32>
    %c0_205 = arith.constant 0 : index
    %c127_206 = arith.constant 127 : index
    %594 = vector.load %arg6[%c0_205, %c127_206] : memref<8x384xf32, #tpu.memory_space<vmem>>, vector<8x128xf32>
    %c96 = arith.constant 96 : index
    %595 = memref.load %arg1[%c96] : memref<120xf32, #tpu.memory_space<smem>>
    %596 = vector.broadcast %595 : f32 to vector<8x128xf32>
    %597 = arith.mulf %594, %596 : vector<8x128xf32>
    %598 = arith.addf %593, %597 : vector<8x128xf32>
    %c0_207 = arith.constant 0 : index
    %c128_208 = arith.constant 128 : index
    %599 = vector.load %arg6[%c0_207, %c128_208] : memref<8x384xf32, #tpu.memory_space<vmem>>, vector<8x128xf32>
    %c97 = arith.constant 97 : index
    %600 = memref.load %arg1[%c97] : memref<120xf32, #tpu.memory_space<smem>>
    %601 = vector.broadcast %600 : f32 to vector<8x128xf32>
    %602 = arith.mulf %599, %601 : vector<8x128xf32>
    %603 = arith.addf %598, %602 : vector<8x128xf32>
    %c0_209 = arith.constant 0 : index
    %c129_210 = arith.constant 129 : index
    %604 = vector.load %arg6[%c0_209, %c129_210] : memref<8x384xf32, #tpu.memory_space<vmem>>, vector<8x128xf32>
    %c98 = arith.constant 98 : index
    %605 = memref.load %arg1[%c98] : memref<120xf32, #tpu.memory_space<smem>>
    %606 = vector.broadcast %605 : f32 to vector<8x128xf32>
    %607 = arith.mulf %604, %606 : vector<8x128xf32>
    %608 = arith.addf %603, %607 : vector<8x128xf32>
    %c0_211 = arith.constant 0 : index
    %c130_212 = arith.constant 130 : index
    %609 = vector.load %arg6[%c0_211, %c130_212] : memref<8x384xf32, #tpu.memory_space<vmem>>, vector<8x128xf32>
    %c99 = arith.constant 99 : index
    %610 = memref.load %arg1[%c99] : memref<120xf32, #tpu.memory_space<smem>>
    %611 = vector.broadcast %610 : f32 to vector<8x128xf32>
    %612 = arith.mulf %609, %611 : vector<8x128xf32>
    %613 = arith.addf %608, %612 : vector<8x128xf32>
    %c19_213 = arith.constant 19 : index
    %614 = memref.load %arg2[%c19_213] : memref<24xf32, #tpu.memory_space<smem>>
    %615 = vector.broadcast %614 : f32 to vector<8x128xf32>
    %616 = arith.addf %613, %615 : vector<8x128xf32>
    %c0_214 = arith.constant 0 : index
    %c128_215 = arith.constant 128 : index
    %617 = vector.load %arg6[%c0_214, %c128_215] : memref<8x384xf32, #tpu.memory_space<vmem>>, vector<8x128xf32>
    tpu.vector_store %arg6[%c0_214, %c128_215], %616 {strides = array<i32>} : memref<8x384xf32, #tpu.memory_space<vmem>>, vector<8x128xf32>,
    %c0_216 = arith.constant 0 : index
    %c126_217 = arith.constant 126 : index
    %618 = vector.load %arg6[%c0_216, %c126_217] : memref<8x384xf32, #tpu.memory_space<vmem>>, vector<8x128xf32>
    %c115 = arith.constant 115 : index
    %619 = memref.load %arg1[%c115] : memref<120xf32, #tpu.memory_space<smem>>
    %620 = vector.broadcast %619 : f32 to vector<8x128xf32>
    %621 = arith.mulf %618, %620 : vector<8x128xf32>
    %c0_218 = arith.constant 0 : index
    %c127_219 = arith.constant 127 : index
    %622 = vector.load %arg6[%c0_218, %c127_219] : memref<8x384xf32, #tpu.memory_space<vmem>>, vector<8x128xf32>
    %c116 = arith.constant 116 : index
    %623 = memref.load %arg1[%c116] : memref<120xf32, #tpu.memory_space<smem>>
    %624 = vector.broadcast %623 : f32 to vector<8x128xf32>
    %625 = arith.mulf %622, %624 : vector<8x128xf32>
    %626 = arith.addf %621, %625 : vector<8x128xf32>
    %c0_220 = arith.constant 0 : index
    %c128_221 = arith.constant 128 : index
    %627 = vector.load %arg6[%c0_220, %c128_221] : memref<8x384xf32, #tpu.memory_space<vmem>>, vector<8x128xf32>
    %c117 = arith.constant 117 : index
    %628 = memref.load %arg1[%c117] : memref<120xf32, #tpu.memory_space<smem>>
    %629 = vector.broadcast %628 : f32 to vector<8x128xf32>
    %630 = arith.mulf %627, %629 : vector<8x128xf32>
    %631 = arith.addf %626, %630 : vector<8x128xf32>
    %c0_222 = arith.constant 0 : index
    %c129_223 = arith.constant 129 : index
    %632 = vector.load %arg6[%c0_222, %c129_223] : memref<8x384xf32, #tpu.memory_space<vmem>>, vector<8x128xf32>
    %c118 = arith.constant 118 : index
    %633 = memref.load %arg1[%c118] : memref<120xf32, #tpu.memory_space<smem>>
    %634 = vector.broadcast %633 : f32 to vector<8x128xf32>
    %635 = arith.mulf %632, %634 : vector<8x128xf32>
    %636 = arith.addf %631, %635 : vector<8x128xf32>
    %c0_224 = arith.constant 0 : index
    %c130_225 = arith.constant 130 : index
    %637 = vector.load %arg6[%c0_224, %c130_225] : memref<8x384xf32, #tpu.memory_space<vmem>>, vector<8x128xf32>
    %c119 = arith.constant 119 : index
    %638 = memref.load %arg1[%c119] : memref<120xf32, #tpu.memory_space<smem>>
    %639 = vector.broadcast %638 : f32 to vector<8x128xf32>
    %640 = arith.mulf %637, %639 : vector<8x128xf32>
    %641 = arith.addf %636, %640 : vector<8x128xf32>
    %c23_226 = arith.constant 23 : index
    %642 = memref.load %arg2[%c23_226] : memref<24xf32, #tpu.memory_space<smem>>
    %643 = vector.broadcast %642 : f32 to vector<8x128xf32>
    %644 = arith.addf %641, %643 : vector<8x128xf32>
    %c0_227 = arith.constant 0 : index
    %c11_228 = arith.constant 11 : index
    %c0_229 = arith.constant 0 : index
    %c0_230 = arith.constant 0 : index
    %645 = vector.load %arg4[%c0_227, %c11_228, %c0_229, %c0_230] : memref<1x12x8x128xf32, #tpu.memory_space<vmem>>, vector<1x1x8x128xf32>
    %646 = vector.shape_cast %645 : vector<1x1x8x128xf32> to vector<8x128xf32>
    %647 = vector.shape_cast %644 : vector<8x128xf32> to vector<1x1x8x128xf32>
    tpu.vector_store %arg4[%c0_227, %c11_228, %c0_229, %c0_230], %647 {strides = array<i32>} : memref<1x12x8x128xf32, #tpu.memory_space<vmem>>, vector<1x1x8x128xf32>,
    return
  }
  func.func @transform_0(%arg0: i32) -> i32 {
    %c0_i32 = arith.constant 0 : i32
    %c0_i32_0 = arith.constant 0 : i32
    return %c0_i32 : i32
  }
  func.func @transform_1(%arg0: i32) -> i32 {
    %c0_i32 = arith.constant 0 : i32
    %c0_i32_0 = arith.constant 0 : i32
    return %c0_i32 : i32
  }
  func.func @transform_2(%arg0: i32) -> (i32, i32, i32) {
    %c0_i32 = arith.constant 0 : i32
    %c0_i32_0 = arith.constant 0 : i32
    %c0_i32_1 = arith.constant 0 : i32
    return %arg0, %c0_i32, %c0_i32_0 : i32, i32, i32
  }
  func.func @transform_3(%arg0: i32) -> (i32, i32, i32, i32) {
    %c0_i32 = arith.constant 0 : i32
    %c0_i32_0 = arith.constant 0 : i32
    %c0_i32_1 = arith.constant 0 : i32
    %c0_i32_2 = arith.constant 0 : i32
    return %arg0, %c0_i32, %c0_i32_0, %c0_i32_1 : i32, i32, i32, i32
  }
}

</mosaic_0001>

<llo_original>
// kernel: dms_conv_forward.1
$region0: #{dms_conv_forward.1}
  #allocation0 [shape = 'u32[]', space=smem, size = 0x4, offset = 0x4, fixed_abs, tag = 'smem constant byte address 0x4 - core index']
  #allocation1 [shape = 'u32[144,128]{1,0:T(1,128)}', space=vmem, size = 0x12000, scoped, tag = 'internal scratch']
  #allocation2 [shape = 'f32[8,384]{1,0:T(8,128)}', space=vmem, size = 0x3000, scoped, tag = 'scratch operand']
  #allocation3 [shape = 'f32[8,384]{1,0:T(8,128)}', space=vmem, size = 0x3000, scoped, tag = 'scratch operand']
  %s0 = inlined_call_operand.hbm [shape: f32[120], index: 0, kind: input, shape index: {}]
  %s1 = inlined_call_operand.hbm [shape: f32[24], index: 1, kind: input, shape index: {}]
  %s2 = inlined_call_operand.hbm [shape: f32[2,8,128], index: 2, kind: input, shape index: {}]
  %s3 = inlined_call_operand.hbm [shape: f32[2,12,8,128], index: 3, kind: output, shape index: {}]
  %s4 = sld [smem:[#allocation0]]
  $region57: #{dms_conv_forward.1} parent=0
    _
  %s6 = ssub.s32 1, %s4
  %s7 = scalar_select 0, %s6, %s4
  $region1: #{dms_conv_forward.1} parent=0
    #allocation4 [shape = 'u8[512]{0}', space=smem, size = 0x200, scoped, tag = 'input window, operand 0, single buffered']
    #allocation5 [shape = 's32[2]{0}', space=sflag, size = 0x8, scoped, tag = 'scoped memory for dms_conv_forward.1']
    #allocation6 [shape = 's32[2]{0}', space=sflag, size = 0x8, scoped, tag = 'scoped memory for dms_conv_forward.1']
    #allocation7 [shape = 's32[2]{0}', space=sflag, size = 0x8, scoped, tag = 'scoped memory for dms_conv_forward.1']
    #allocation8 [shape = 'u8[512]{0}', space=smem, size = 0x200, scoped, tag = 'input window, operand 1, single buffered']
    #allocation9 [shape = 's32[1]{0}', space=sflag, size = 0x4, scoped, tag = 'scoped memory for dms_conv_forward.1']
    #allocation10 [shape = 'u8[8192]{0}', space=vmem, size = 0x2000, scoped, tag = 'input window, operand 2']
    #allocation11 [shape = 'u8[98304]{0}', space=vmem, size = 0x18000, scoped, tag = 'output window, operand 0']
    %8 = vsyncpa [#allocation7], 0
    %9 = vsyncpa [#allocation9], 0
    %10 = vsyncpa [#allocation5], 0
    %s11 = scalar_lea.sflag [#allocation5], 1
    %12 = vsyncpa %s11, 0
    %13 = vsyncpa [#allocation6], 0
    %s14 = scalar_lea.sflag [#allocation6], 1
    %15 = vsyncpa %s14, 0
    loop: start=0, step=1, limit=4
    $region2: #{dms_conv_forward.1} parent=1 // loop_pre_header
      _
    $region3: #{dms_conv_forward.1} parent=1 // loop_header
      %s17 = sphi 0, %s21
      %p18 = scmp.ge.s32.totalorder %s17, 4
      %s25 = sphi 0, %s25
      %s27 = sphi 0, %s25
      %s28 = sphi 0, %s27
      %s42 = sphi 0, %s28
      %s46 = sphi 0, %s46
      %s48 = sphi 0, %s46
      %s49 = sphi 0, %s48
      %s63 = sphi 0, %s49
      %s69 = sphi 0, %s71
      %s72 = sphi 0, %s69
      %s73 = sphi 0, %s72
      %s89 = sphi 0, %s73
      %s95 = sphi 0, %s97
      %s98 = sphi 0, %s95
      %s99 = sphi 0, %s98
      %s115 = sphi 0, %s99
    $region4: #{dms_conv_forward.1} parent=1 // loop_header_branch
      %20 = sbr.rel (%p18) target = $region8
    $region5: #{dms_conv_forward.1} parent=1 // loop_body
      %s22 = ssub.s32 %s17, 1
      %s23 = ssub.s32 %s17, 2
      %s24 = sadd.s32 %s17, 1
      %s26 = sadd.s32 %s25, 1
      %p29 = scmp.eq.s32.totalorder %s17, 1
      %p30 = scmp.ne.s32.totalorder %s25, %s27
      %p31 = scmp.eq.s32.totalorder %s17, 0
      %p32 = por %p30, %p31
      %p33 = scmp.ne.s32.totalorder %s25, %s27
      %p34 = scmp.eq.s32.totalorder %s22, 1
      %p35 = por %p33, %p34
      %p36 = scmp.ne.s32.totalorder %s27, %s28
      %p37 = scmp.eq.s32.totalorder %s22, 0
      %p38 = por %p36, %p37
      %p39 = scmp.ne.s32.totalorder %s27, %s28
      %p40 = scmp.eq.s32.totalorder %s23, 1
      %p41 = por %p39, %p40
      %p43 = scmp.ne.s32.totalorder %s28, %s42
      %p44 = scmp.eq.s32.totalorder %s23, 0
      %p45 = por %p43, %p44
      %s47 = sadd.s32 %s46, 1
      %p50 = scmp.eq.s32.totalorder %s17, 1
      %p51 = scmp.ne.s32.totalorder %s46, %s48
      %p52 = scmp.eq.s32.totalorder %s17, 0
      %p53 = por %p51, %p52
      %p54 = scmp.ne.s32.totalorder %s46, %s48
      %p55 = scmp.eq.s32.totalorder %s22, 1
      %p56 = por %p54, %p55
      %p57 = scmp.ne.s32.totalorder %s48, %s49
      %p58 = scmp.eq.s32.totalorder %s22, 0
      %p59 = por %p57, %p58
      %p60 = scmp.ne.s32.totalorder %s48, %s49
      %p61 = scmp.eq.s32.totalorder %s23, 1
      %p62 = por %p60, %p61
      %p64 = scmp.ne.s32.totalorder %s49, %s63
      %p65 = scmp.eq.s32.totalorder %s23, 0
      %p66 = por %p64, %p65
      %s67 = ssub.s32 %s17, %s24
      %p68 = scmp.eq.s32.totalorder %s67, 0
      %s70 = sadd.s32 %s69, 1
      %s71 = scalar_select %p68, %s69, %s70
      %p74 = pneg %p68
      %p75 = scmp.eq.s32.totalorder %s17, 1
      %p76 = por %p74, %p75
      %p77 = scmp.ne.s32.totalorder %s69, %s72
      %p78 = scmp.eq.s32.totalorder %s17, 0
      %p79 = por %p77, %p78
      %p80 = scmp.ne.s32.totalorder %s69, %s72
      %p81 = scmp.eq.s32.totalorder %s22, 1
      %p82 = por %p80, %p81
      %p83 = scmp.ne.s32.totalorder %s72, %s73
      %p84 = scmp.eq.s32.totalorder %s22, 0
      %p85 = por %p83, %p84
      %p86 = scmp.ne.s32.totalorder %s72, %s73
      %p87 = scmp.eq.s32.totalorder %s23, 1
      %p88 = por %p86, %p87
      %p90 = scmp.ne.s32.totalorder %s73, %s89
      %p91 = scmp.eq.s32.totalorder %s23, 0
      %p92 = por %p90, %p91
      %s93 = ssub.s32 %s17, %s24
      %p94 = scmp.eq.s32.totalorder %s93, 0
      %s96 = sadd.s32 %s95, 1
      %s97 = scalar_select %p94, %s95, %s96
      %p100 = pneg %p94
      %p101 = scmp.eq.s32.totalorder %s17, 1
      %p102 = por %p100, %p101
      %p103 = scmp.ne.s32.totalorder %s95, %s98
      %p104 = scmp.eq.s32.totalorder %s17, 0
      %p105 = por %p103, %p104
      %p106 = scmp.ne.s32.totalorder %s95, %s98
      %p107 = scmp.eq.s32.totalorder %s22, 1
      %p108 = por %p106, %p107
      %p109 = scmp.ne.s32.totalorder %s98, %s99
      %p110 = scmp.eq.s32.totalorder %s22, 0
      %p111 = por %p109, %p110
      %p112 = scmp.ne.s32.totalorder %s98, %s99
      %p113 = scmp.eq.s32.totalorder %s23, 1
      %p114 = por %p112, %p113
      %p116 = scmp.ne.s32.totalorder %s99, %s115
      %p117 = scmp.eq.s32.totalorder %s23, 0
      %p118 = por %p116, %p117
      %p119 = scmp.le.s32.totalorder 1, %s17
      %p120 = scmp.lt.s32.totalorder %s17, 3
      %p121 = pnand %p119, %p120
      %p122 = pneg %p121
      // Predicated region
      $region9: #{dms_conv_forward.1} parent=5 // pred_check
        _
      $region10: #{dms_conv_forward.1} parent=5 // pred_check_branch
        %124 = sbr.rel (%p121) target = $region12
      $region11: #{dms_conv_forward.1} parent=5 // pred_region
        %s125 = ssub.s32 %s17, 1
        // Predicated region
        $region13: #{dms_conv_forward.1} parent=11 // pred_check
          %p126 = pneg %p38
        $region14: #{dms_conv_forward.1} parent=11 // pred_check_branch
          %128 = sbr.rel (%p126) target = $region16
        $region15: #{dms_conv_forward.1} parent=11 // pred_region
          %s130 = ssub.s32 16, 16
          %131 = vsyncadd [#allocation7], %s130
          %134 = dma.hbm_to_smem %s0, 16, [#allocation4], [#allocation7]
        $region16: #{dms_conv_forward.1} parent=11 // pred_fallthru
          _
        // Predicated region
        $region17: #{dms_conv_forward.1} parent=11 // pred_check
          %p135 = pneg %p59
        $region18: #{dms_conv_forward.1} parent=11 // pred_check_branch
          %137 = sbr.rel (%p135) target = $region20
        $region19: #{dms_conv_forward.1} parent=11 // pred_region
          %s139 = ssub.s32 16, 16
          %140 = vsyncadd [#allocation9], %s139
          %143 = dma.hbm_to_smem %s1, 16, [#allocation8], [#allocation9]
        $region20: #{dms_conv_forward.1} parent=11 // pred_fallthru
          _
      $region12: #{dms_conv_forward.1} parent=5 // pred_fallthru
        _
      %p144 = scmp.lt.s32.totalorder %s17, 2
      // Predicated region
      $region21: #{dms_conv_forward.1} parent=5 // pred_check
        %p145 = pneg %p144
      $region22: #{dms_conv_forward.1} parent=5 // pred_check_branch
        %147 = sbr.rel (%p145) target = $region24
      $region23: #{dms_conv_forward.1} parent=5 // pred_region
        // Predicated region
        $region25: #{dms_conv_forward.1} parent=23 // pred_check
          %p148 = pneg %p79
        $region26: #{dms_conv_forward.1} parent=23 // pred_check_branch
          %150 = sbr.rel (%p148) target = $region28
        $region27: #{dms_conv_forward.1} parent=23 // pred_region
          %s151 = sand.u32 %s69, 1
          %s152 = scalar_lea.sflag [#allocation5], %s151
          %s153 = sand.u32 %s69, 1
          %s154 = smul.addr %s153, 8
          %s155 = scalar_lea.vmem [#allocation10], %s154
          %s157 = ssub.s32 128, 128
          %158 = vsyncadd %s152, %s157
          %s159 = smul.addr %s17, 128
          %s160 = scalar_lea.hbm %s2, %s159
          %s162 = sshll.u32 %s155, 4
          %s163 = int_to_ptr.vmem [resolvable:$true] %s162
          %165 = dma.hbm_to_vmem [thread:$0]  %s160, 128, %s163, %s152
        $region28: #{dms_conv_forward.1} parent=23 // pred_fallthru
          _
      $region24: #{dms_conv_forward.1} parent=5 // pred_fallthru
        _
      %p166 = scmp.le.s32.totalorder 1, %s17
      %p167 = scmp.lt.s32.totalorder %s17, 3
      %p168 = pnand %p166, %p167
      %p169 = pneg %p168
      // Predicated region
      $region29: #{dms_conv_forward.1} parent=5 // pred_check
        _
      $region30: #{dms_conv_forward.1} parent=5 // pred_check_branch
        %171 = sbr.rel (%p168) target = $region32
      $region31: #{dms_conv_forward.1} parent=5 // pred_region
        %s172 = ssub.s32 %s17, 1
        // Predicated region
        $region33: #{dms_conv_forward.1} parent=31 // pred_check
          %p173 = pneg %p38
        $region34: #{dms_conv_forward.1} parent=31 // pred_check_branch
          %175 = sbr.rel (%p173) target = $region36
        $region35: #{dms_conv_forward.1} parent=31 // pred_region
          %176 = dma.done [#allocation7], 16
        $region36: #{dms_conv_forward.1} parent=31 // pred_fallthru
          _
        // Predicated region
        $region37: #{dms_conv_forward.1} parent=31 // pred_check
          %p177 = pneg %p59
        $region38: #{dms_conv_forward.1} parent=31 // pred_check_branch
          %179 = sbr.rel (%p177) target = $region40
        $region39: #{dms_conv_forward.1} parent=31 // pred_region
          %180 = dma.done [#allocation9], 16
        $region40: #{dms_conv_forward.1} parent=31 // pred_fallthru
          _
        %s181 = sand.u32 %s72, 1
        %s182 = scalar_lea.sflag [#allocation5], %s181
        %s183 = sand.u32 %s72, 1
        %s184 = smul.addr %s183, 8
        %s185 = scalar_lea.vmem [#allocation10], %s184
        // Predicated region
        $region41: #{dms_conv_forward.1} parent=31 // pred_check
          %p186 = pneg %p85
        $region42: #{dms_conv_forward.1} parent=31 // pred_check_branch
          %188 = sbr.rel (%p186) target = $region44
        $region43: #{dms_conv_forward.1} parent=31 // pred_region
          %189 = dma.done %s182, 128
        $region44: #{dms_conv_forward.1} parent=31 // pred_fallthru
          _
        %190 = sfence
        %p191 = pneg %p38
        %p192 = pneg %p35
        %p193 = pneg %p59
        %p194 = pneg %p56
        %s195 = sand.u32 %s72, 1
        %s196 = scalar_lea.sflag [#allocation5], %s195
        %s197 = sand.u32 %s72, 1
        %s198 = smul.addr %s197, 8
        %s199 = scalar_lea.vmem [#allocation10], %s198
        %p200 = pneg %p85
        %p201 = pneg %p82
        %p202 = pneg %p111
        %p203 = pneg %p108
        %s204 = sand.u32 %s98, 1
        %s205 = scalar_lea.sflag [#allocation6], %s204
        %s206 = sand.u32 %s98, 1
        %s207 = smul.addr %s206, 96
        %s208 = scalar_lea.vmem [#allocation11], %s207
        %209 = vst [vmem:[#allocation2] sm:$0xff] 0.0
        %210 = vst [vmem:[#allocation2 + $0x8] sm:$0xff] 0.0
        %211 = vst [vmem:[#allocation2 + $0x10] sm:$0xff] 0.0
        %212 = vst [vmem:[#allocation3] sm:$0xff] 0.0
        %213 = vst [vmem:[#allocation3 + $0x8] sm:$0xff] 0.0
        %214 = vst [vmem:[#allocation3 + $0x10] sm:$0xff] 0.0
        %v215 = vld [vmem:[%s185] sm:$0xff]
        %216 = vst [vmem:[#allocation2 + $0x8] sm:$0xff] %v215
        %v217 = vld [vmem:[#allocation2] sm:$0xff]
        %v218 = vld [vmem:[#allocation2 + $0x8] sm:$0xff]
        %v219 = vld [vmem:[#allocation2 + $0x8] sm:$0xff]
        %v220 = vld [vmem:[#allocation2 + $0x10] sm:$0xff]
        %s221 = sld [smem:[#allocation4]]
        %v222 = vstv %s221
        %v223 = vmul.f32 %v217, %v222
        %v224 = vmul.f32 %v218, %v222
        %s225 = sld [smem:[#allocation4 + $0x1]]
        %v226 = vstv %s225
        %v227 = vmul.f32 %v217, %v226
        %v228 = vmul.f32 %v218, %v226
        %231 = vrot.lane.b32.xlu0 %v227, 127
        %v232 = vpop.permute.xlu0 %231
        %233 = vrot.lane.b32.xlu0 %v228, 127
        %v234 = vpop.permute.xlu0 %233
        %vm235 = vcmask 1039360
        %v236 = vsel %vm235, %v232, %v234
        %v239 = vadd.f32 %v223, %v236
        %v240 = vadd.f32 %v224, %v234
        %s241 = sld [smem:[#allocation4 + $0x2]]
        %v242 = vstv %s241
        %v243 = vmul.f32 %v218, %v242
        %245 = vrot.lane.b32.xlu0 %v243, 126
        %v246 = vpop.permute.xlu0 %245
        %v248 = vadd.f32 %v239, %v246
        %v249 = vadd.f32 %v240, %v246
        %s250 = sld [smem:[#allocation4 + $0x3]]
        %v251 = vstv %s250
        %v252 = vmul.f32 %v219, %v251
        %v253 = vmul.f32 %v220, %v251
        %256 = vrot.lane.b32.xlu0 %v252, 125
        %v257 = vpop.permute.xlu0 %256
        %258 = vrot.lane.b32.xlu0 %v253, 125
        %v259 = vpop.permute.xlu0 %258
        %vm260 = vcmask 1022976
        %v261 = vsel %vm260, %v257, %v259
        %v264 = vadd.f32 %v248, %v257
        %v265 = vadd.f32 %v249, %v261
        %s266 = sld [smem:[#allocation4 + $0x4]]
        %v267 = vstv %s266
        %v268 = vmul.f32 %v219, %v267
        %v269 = vmul.f32 %v220, %v267
        %272 = vrot.lane.b32.xlu0 %v268, 124
        %v273 = vpop.permute.xlu0 %272
        %274 = vrot.lane.b32.xlu0 %v269, 124
        %v275 = vpop.permute.xlu0 %274
        %vm276 = vcmask 1014784
        %v277 = vsel %vm276, %v273, %v275
        %v280 = vadd.f32 %v264, %v273
        %v281 = vadd.f32 %v265, %v277
        %s282 = sld [smem:[#allocation8]]
        %v283 = vstv %s282
        %v284 = vadd.f32 %v280, %v283
        %v285 = vadd.f32 %v281, %v283
        %288 = vrot.lane.b32.xlu0 %v284, 2
        %v289 = vpop.permute.xlu0 %288
        %290 = vrot.lane.b32.xlu0 %v285, 2
        %v291 = vpop.permute.xlu0 %290
        %vm292 = vcmask 15360
        %v293 = vsel %vm292, %v289, %v291
        %295 = vst [vmem:[%s208] sm:$0xff] %v293
        %s296 = sld [smem:[#allocation4 + $0x14]]
        %v297 = vstv %s296
        %v298 = vmul.f32 %v217, %v297
        %v299 = vmul.f32 %v218, %v297
        %s300 = sld [smem:[#allocation4 + $0x15]]
        %v301 = vstv %s300
        %v302 = vmul.f32 %v217, %v301
        %v303 = vmul.f32 %v218, %v301
        %306 = vrot.lane.b32.xlu0 %v302, 127
        %v307 = vpop.permute.xlu0 %306
        %308 = vrot.lane.b32.xlu0 %v303, 127
        %v309 = vpop.permute.xlu0 %308
        %v310 = vsel %vm235, %v307, %v309
        %v313 = vadd.f32 %v298, %v310
        %v314 = vadd.f32 %v299, %v309
        %s315 = sld [smem:[#allocation4 + $0x16]]
        %v316 = vstv %s315
        %v317 = vmul.f32 %v218, %v316
        %319 = vrot.lane.b32.xlu0 %v317, 126
        %v320 = vpop.permute.xlu0 %319
        %v322 = vadd.f32 %v313, %v320
        %v323 = vadd.f32 %v314, %v320
        %s324 = sld [smem:[#allocation4 + $0x17]]
        %v325 = vstv %s324
        %v326 = vmul.f32 %v219, %v325
        %v327 = vmul.f32 %v220, %v325
        %330 = vrot.lane.b32.xlu0 %v326, 125
        %v331 = vpop.permute.xlu0 %330
        %332 = vrot.lane.b32.xlu0 %v327, 125
        %v333 = vpop.permute.xlu0 %332
        %v334 = vsel %vm260, %v331, %v333
        %v337 = vadd.f32 %v322, %v331
        %v338 = vadd.f32 %v323, %v334
        %s339 = sld [smem:[#allocation4 + $0x18]]
        %v340 = vstv %s339
        %v341 = vmul.f32 %v219, %v340
        %v342 = vmul.f32 %v220, %v340
        %345 = vrot.lane.b32.xlu0 %v341, 124
        %v346 = vpop.permute.xlu0 %345
        %347 = vrot.lane.b32.xlu0 %v342, 124
        %v348 = vpop.permute.xlu0 %347
        %v349 = vsel %vm276, %v346, %v348
        %v352 = vadd.f32 %v337, %v346
        %v353 = vadd.f32 %v338, %v349
        %s354 = sld [smem:[#allocation8 + $0x4]]
        %v355 = vstv %s354
        %v356 = vadd.f32 %v352, %v355
        %v357 = vadd.f32 %v353, %v355
        %360 = vrot.lane.b32.xlu0 %v356, 2
        %v361 = vpop.permute.xlu0 %360
        %362 = vrot.lane.b32.xlu0 %v357, 2
        %v363 = vpop.permute.xlu0 %362
        %v364 = vsel %vm292, %v361, %v363
        %366 = vst [vmem:[#allocation3 + $0x8] sm:$0xff] %v364
        %v367 = vld [vmem:[#allocation3] sm:$0xff]
        %v368 = vld [vmem:[#allocation3 + $0x8] sm:$0xff]
        %s369 = sld [smem:[#allocation4 + $0x28]]
        %v370 = vstv %s369
        %v371 = vmul.f32 %v367, %v370
        %v372 = vmul.f32 %v368, %v370
        %s373 = sld [smem:[#allocation4 + $0x29]]
        %v374 = vstv %s373
        %v375 = vmul.f32 %v367, %v374
        %v376 = vmul.f32 %v368, %v374
        %379 = vrot.lane.b32.xlu0 %v375, 127
        %v380 = vpop.permute.xlu0 %379
        %381 = vrot.lane.b32.xlu0 %v376, 127
        %v382 = vpop.permute.xlu0 %381
        %v383 = vsel %vm235, %v380, %v382
        %v386 = vadd.f32 %v371, %v383
        %v387 = vadd.f32 %v372, %v382
        %s388 = sld [smem:[#allocation4 + $0x2a]]
        %v389 = vstv %s388
        %v390 = vmul.f32 %v368, %v389
        %392 = vrot.lane.b32.xlu0 %v390, 126
        %v393 = vpop.permute.xlu0 %392
        %v395 = vadd.f32 %v386, %v393
        %v396 = vadd.f32 %v387, %v393
        %v397 = vld [vmem:[#allocation3 + $0x8] sm:$0xff]
        %v398 = vld [vmem:[#allocation3 + $0x10] sm:$0xff]
        %s399 = sld [smem:[#allocation4 + $0x2b]]
        %v400 = vstv %s399
        %v401 = vmul.f32 %v397, %v400
        %v402 = vmul.f32 %v398, %v400
        %405 = vrot.lane.b32.xlu0 %v401, 125
        %v406 = vpop.permute.xlu0 %405
        %407 = vrot.lane.b32.xlu0 %v402, 125
        %v408 = vpop.permute.xlu0 %407
        %v409 = vsel %vm260, %v406, %v408
        %v412 = vadd.f32 %v395, %v406
        %v413 = vadd.f32 %v396, %v409
        %s414 = sld [smem:[#allocation4 + $0x2c]]
        %v415 = vstv %s414
        %v416 = vmul.f32 %v397, %v415
        %v417 = vmul.f32 %v398, %v415
        %420 = vrot.lane.b32.xlu0 %v416, 124
        %v421 = vpop.permute.xlu0 %420
        %422 = vrot.lane.b32.xlu0 %v417, 124
        %v423 = vpop.permute.xlu0 %422
        %v424 = vsel %vm276, %v421, %v423
        %v427 = vadd.f32 %v412, %v421
        %v428 = vadd.f32 %v413, %v424
        %s429 = sld [smem:[#allocation8 + $0x8]]
        %v430 = vstv %s429
        %v431 = vadd.f32 %v427, %v430
        %v432 = vadd.f32 %v428, %v430
        %435 = vrot.lane.b32.xlu0 %v431, 2
        %v436 = vpop.permute.xlu0 %435
        %437 = vrot.lane.b32.xlu0 %v432, 2
        %v438 = vpop.permute.xlu0 %437
        %v439 = vsel %vm292, %v436, %v438
        %s441 = scalar_lea.vmem %s208, 32 [#allocation11]
        %442 = vst [vmem:[%s441] sm:$0xff] %v439
        %s443 = sld [smem:[#allocation4 + $0x3c]]
        %v444 = vstv %s443
        %v445 = vmul.f32 %v217, %v444
        %v446 = vmul.f32 %v218, %v444
        %s447 = sld [smem:[#allocation4 + $0x3d]]
        %v448 = vstv %s447
        %v449 = vmul.f32 %v217, %v448
        %v450 = vmul.f32 %v218, %v448
        %453 = vrot.lane.b32.xlu0 %v449, 127
        %v454 = vpop.permute.xlu0 %453
        %455 = vrot.lane.b32.xlu0 %v450, 127
        %v456 = vpop.permute.xlu0 %455
        %v457 = vsel %vm235, %v454, %v456
        %v460 = vadd.f32 %v445, %v457
        %v461 = vadd.f32 %v446, %v456
        %s462 = sld [smem:[#allocation4 + $0x3e]]
        %v463 = vstv %s462
        %v464 = vmul.f32 %v218, %v463
        %466 = vrot.lane.b32.xlu0 %v464, 126
        %v467 = vpop.permute.xlu0 %466
        %v469 = vadd.f32 %v460, %v467
        %v470 = vadd.f32 %v461, %v467
        %s471 = sld [smem:[#allocation4 + $0x3f]]
        %v472 = vstv %s471
        %v473 = vmul.f32 %v219, %v472
        %v474 = vmul.f32 %v220, %v472
        %477 = vrot.lane.b32.xlu0 %v473, 125
        %v478 = vpop.permute.xlu0 %477
        %479 = vrot.lane.b32.xlu0 %v474, 125
        %v480 = vpop.permute.xlu0 %479
        %v481 = vsel %vm260, %v478, %v480
        %v484 = vadd.f32 %v469, %v478
        %v485 = vadd.f32 %v470, %v481
        %s486 = sld [smem:[#allocation4 + $0x40]]
        %v487 = vstv %s486
        %v488 = vmul.f32 %v219, %v487
        %v489 = vmul.f32 %v220, %v487
        %492 = vrot.lane.b32.xlu0 %v488, 124
        %v493 = vpop.permute.xlu0 %492
        %494 = vrot.lane.b32.xlu0 %v489, 124
        %v495 = vpop.permute.xlu0 %494
        %v496 = vsel %vm276, %v493, %v495
        %v499 = vadd.f32 %v484, %v493
        %v500 = vadd.f32 %v485, %v496
        %s501 = sld [smem:[#allocation8 + $0xc]]
        %v502 = vstv %s501
        %v503 = vadd.f32 %v499, %v502
        %v504 = vadd.f32 %v500, %v502
        %507 = vrot.lane.b32.xlu0 %v503, 2
        %v508 = vpop.permute.xlu0 %507
        %509 = vrot.lane.b32.xlu0 %v504, 2
        %v510 = vpop.permute.xlu0 %509
        %v511 = vsel %vm292, %v508, %v510
        %513 = vst [vmem:[#allocation3 + $0x8] sm:$0xff] %v511
        %v514 = vld [vmem:[#allocation3] sm:$0xff]
        %v515 = vld [vmem:[#allocation3 + $0x8] sm:$0xff]
        %s516 = sld [smem:[#allocation4 + $0x50]]
        %v517 = vstv %s516
        %v518 = vmul.f32 %v514, %v517
        %v519 = vmul.f32 %v515, %v517
        %s520 = sld [smem:[#allocation4 + $0x51]]
        %v521 = vstv %s520
        %v522 = vmul.f32 %v514, %v521
        %v523 = vmul.f32 %v515, %v521
        %526 = vrot.lane.b32.xlu0 %v522, 127
        %v527 = vpop.permute.xlu0 %526
        %528 = vrot.lane.b32.xlu0 %v523, 127
        %v529 = vpop.permute.xlu0 %528
        %v530 = vsel %vm235, %v527, %v529
        %v533 = vadd.f32 %v518, %v530
        %v534 = vadd.f32 %v519, %v529
        %s535 = sld [smem:[#allocation4 + $0x52]]
        %v536 = vstv %s535
        %v537 = vmul.f32 %v515, %v536
        %539 = vrot.lane.b32.xlu0 %v537, 126
        %v540 = vpop.permute.xlu0 %539
        %v542 = vadd.f32 %v533, %v540
        %v543 = vadd.f32 %v534, %v540
        %v544 = vld [vmem:[#allocation3 + $0x8] sm:$0xff]
        %v545 = vld [vmem:[#allocation3 + $0x10] sm:$0xff]
        %s546 = sld [smem:[#allocation4 + $0x53]]
        %v547 = vstv %s546
        %v548 = vmul.f32 %v544, %v547
        %v549 = vmul.f32 %v545, %v547
        %552 = vrot.lane.b32.xlu0 %v548, 125
        %v553 = vpop.permute.xlu0 %552
        %554 = vrot.lane.b32.xlu0 %v549, 125
        %v555 = vpop.permute.xlu0 %554
        %v556 = vsel %vm260, %v553, %v555
        %v559 = vadd.f32 %v542, %v553
        %v560 = vadd.f32 %v543, %v556
        %s561 = sld [smem:[#allocation4 + $0x54]]
        %v562 = vstv %s561
        %v563 = vmul.f32 %v544, %v562
        %v564 = vmul.f32 %v545, %v562
        %567 = vrot.lane.b32.xlu0 %v563, 124
        %v568 = vpop.permute.xlu0 %567
        %569 = vrot.lane.b32.xlu0 %v564, 124
        %v570 = vpop.permute.xlu0 %569
        %v571 = vsel %vm276, %v568, %v570
        %v574 = vadd.f32 %v559, %v568
        %v575 = vadd.f32 %v560, %v571
        %s576 = sld [smem:[#allocation8 + $0x10]]
        %v577 = vstv %s576
        %v578 = vadd.f32 %v574, %v577
        %v579 = vadd.f32 %v575, %v577
        %582 = vrot.lane.b32.xlu0 %v578, 2
        %v583 = vpop.permute.xlu0 %582
        %584 = vrot.lane.b32.xlu0 %v579, 2
        %v585 = vpop.permute.xlu0 %584
        %v586 = vsel %vm292, %v583, %v585
        %588 = vst [vmem:[#allocation3 + $0x8] sm:$0xff] %v586
        %v589 = vld [vmem:[#allocation3] sm:$0xff]
        %v590 = vld [vmem:[#allocation3 + $0x8] sm:$0xff]
        %s591 = sld [smem:[#allocation4 + $0x64]]
        %v592 = vstv %s591
        %v593 = vmul.f32 %v589, %v592
        %v594 = vmul.f32 %v590, %v592
        %s595 = sld [smem:[#allocation4 + $0x65]]
        %v596 = vstv %s595
        %v597 = vmul.f32 %v589, %v596
        %v598 = vmul.f32 %v590, %v596
        %601 = vrot.lane.b32.xlu0 %v597, 127
        %v602 = vpop.permute.xlu0 %601
        %603 = vrot.lane.b32.xlu0 %v598, 127
        %v604 = vpop.permute.xlu0 %603
        %v605 = vsel %vm235, %v602, %v604
        %v608 = vadd.f32 %v593, %v605
        %v609 = vadd.f32 %v594, %v604
        %s610 = sld [smem:[#allocation4 + $0x66]]
        %v611 = vstv %s610
        %v612 = vmul.f32 %v590, %v611
        %614 = vrot.lane.b32.xlu0 %v612, 126
        %v615 = vpop.permute.xlu0 %614
        %v617 = vadd.f32 %v608, %v615
        %v618 = vadd.f32 %v609, %v615
        %v619 = vld [vmem:[#allocation3 + $0x8] sm:$0xff]
        %v620 = vld [vmem:[#allocation3 + $0x10] sm:$0xff]
        %s621 = sld [smem:[#allocation4 + $0x67]]
        %v622 = vstv %s621
        %v623 = vmul.f32 %v619, %v622
        %v624 = vmul.f32 %v620, %v622
        %627 = vrot.lane.b32.xlu0 %v623, 125
        %v628 = vpop.permute.xlu0 %627
        %629 = vrot.lane.b32.xlu0 %v624, 125
        %v630 = vpop.permute.xlu0 %629
        %v631 = vsel %vm260, %v628, %v630
        %v634 = vadd.f32 %v617, %v628
        %v635 = vadd.f32 %v618, %v631
        %s636 = sld [smem:[#allocation4 + $0x68]]
        %v637 = vstv %s636
        %v638 = vmul.f32 %v619, %v637
        %v639 = vmul.f32 %v620, %v637
        %642 = vrot.lane.b32.xlu0 %v638, 124
        %v643 = vpop.permute.xlu0 %642
        %644 = vrot.lane.b32.xlu0 %v639, 124
        %v645 = vpop.permute.xlu0 %644
        %v646 = vsel %vm276, %v643, %v645
        %v649 = vadd.f32 %v634, %v643
        %v650 = vadd.f32 %v635, %v646
        %s651 = sld [smem:[#allocation8 + $0x14]]
        %v652 = vstv %s651
        %v653 = vadd.f32 %v649, %v652
        %v654 = vadd.f32 %v650, %v652
        %657 = vrot.lane.b32.xlu0 %v653, 2
        %v658 = vpop.permute.xlu0 %657
        %659 = vrot.lane.b32.xlu0 %v654, 2
        %v660 = vpop.permute.xlu0 %659
        %v661 = vsel %vm292, %v658, %v660
        %s663 = scalar_lea.vmem %s208, 64 [#allocation11]
        %664 = vst [vmem:[%s663] sm:$0xff] %v661
        %s665 = sld [smem:[#allocation4 + $0x5]]
        %v666 = vstv %s665
        %v667 = vmul.f32 %v217, %v666
        %v668 = vmul.f32 %v218, %v666
        %s669 = sld [smem:[#allocation4 + $0x6]]
        %v670 = vstv %s669
        %v671 = vmul.f32 %v217, %v670
        %v672 = vmul.f32 %v218, %v670
        %675 = vrot.lane.b32.xlu0 %v671, 127
        %v676 = vpop.permute.xlu0 %675
        %677 = vrot.lane.b32.xlu0 %v672, 127
        %v678 = vpop.permute.xlu0 %677
        %v679 = vsel %vm235, %v676, %v678
        %v682 = vadd.f32 %v667, %v679
        %v683 = vadd.f32 %v668, %v678
        %s684 = sld [smem:[#allocation4 + $0x7]]
        %v685 = vstv %s684
        %v686 = vmul.f32 %v218, %v685
        %688 = vrot.lane.b32.xlu0 %v686, 126
        %v689 = vpop.permute.xlu0 %688
        %v691 = vadd.f32 %v682, %v689
        %v692 = vadd.f32 %v683, %v689
        %s693 = sld [smem:[#allocation4 + $0x8]]
        %v694 = vstv %s693
        %v695 = vmul.f32 %v219, %v694
        %v696 = vmul.f32 %v220, %v694
        %699 = vrot.lane.b32.xlu0 %v695, 125
        %v700 = vpop.permute.xlu0 %699
        %701 = vrot.lane.b32.xlu0 %v696, 125
        %v702 = vpop.permute.xlu0 %701
        %v703 = vsel %vm260, %v700, %v702
        %v706 = vadd.f32 %v691, %v700
        %v707 = vadd.f32 %v692, %v703
        %s708 = sld [smem:[#allocation4 + $0x9]]
        %v709 = vstv %s708
        %v710 = vmul.f32 %v219, %v709
        %v711 = vmul.f32 %v220, %v709
        %714 = vrot.lane.b32.xlu0 %v710, 124
        %v715 = vpop.permute.xlu0 %714
        %716 = vrot.lane.b32.xlu0 %v711, 124
        %v717 = vpop.permute.xlu0 %716
        %v718 = vsel %vm276, %v715, %v717
        %v721 = vadd.f32 %v706, %v715
        %v722 = vadd.f32 %v707, %v718
        %s723 = sld [smem:[#allocation8 + $0x1]]
        %v724 = vstv %s723
        %v725 = vadd.f32 %v721, %v724
        %v726 = vadd.f32 %v722, %v724
        %729 = vrot.lane.b32.xlu0 %v725, 2
        %v730 = vpop.permute.xlu0 %729
        %731 = vrot.lane.b32.xlu0 %v726, 2
        %v732 = vpop.permute.xlu0 %731
        %v733 = vsel %vm292, %v730, %v732
        %s735 = scalar_lea.vmem %s208, 8 [#allocation11]
        %736 = vst [vmem:[%s735] sm:$0xff] %v733
        %s737 = sld [smem:[#allocation4 + $0x19]]
        %v738 = vstv %s737
        %v739 = vmul.f32 %v217, %v738
        %v740 = vmul.f32 %v218, %v738
        %s741 = sld [smem:[#allocation4 + $0x1a]]
        %v742 = vstv %s741
        %v743 = vmul.f32 %v217, %v742
        %v744 = vmul.f32 %v218, %v742
        %747 = vrot.lane.b32.xlu0 %v743, 127
        %v748 = vpop.permute.xlu0 %747
        %749 = vrot.lane.b32.xlu0 %v744, 127
        %v750 = vpop.permute.xlu0 %749
        %v751 = vsel %vm235, %v748, %v750
        %v754 = vadd.f32 %v739, %v751
        %v755 = vadd.f32 %v740, %v750
        %s756 = sld [smem:[#allocation4 + $0x1b]]
        %v757 = vstv %s756
        %v758 = vmul.f32 %v218, %v757
        %760 = vrot.lane.b32.xlu0 %v758, 126
        %v761 = vpop.permute.xlu0 %760
        %v763 = vadd.f32 %v754, %v761
        %v764 = vadd.f32 %v755, %v761
        %s765 = sld [smem:[#allocation4 + $0x1c]]
        %v766 = vstv %s765
        %v767 = vmul.f32 %v219, %v766
        %v768 = vmul.f32 %v220, %v766
        %771 = vrot.lane.b32.xlu0 %v767, 125
        %v772 = vpop.permute.xlu0 %771
        %773 = vrot.lane.b32.xlu0 %v768, 125
        %v774 = vpop.permute.xlu0 %773
        %v775 = vsel %vm260, %v772, %v774
        %v778 = vadd.f32 %v763, %v772
        %v779 = vadd.f32 %v764, %v775
        %s780 = sld [smem:[#allocation4 + $0x1d]]
        %v781 = vstv %s780
        %v782 = vmul.f32 %v219, %v781
        %v783 = vmul.f32 %v220, %v781
        %786 = vrot.lane.b32.xlu0 %v782, 124
        %v787 = vpop.permute.xlu0 %786
        %788 = vrot.lane.b32.xlu0 %v783, 124
        %v789 = vpop.permute.xlu0 %788
        %v790 = vsel %vm276, %v787, %v789
        %v793 = vadd.f32 %v778, %v787
        %v794 = vadd.f32 %v779, %v790
        %s795 = sld [smem:[#allocation8 + $0x5]]
        %v796 = vstv %s795
        %v797 = vadd.f32 %v793, %v796
        %v798 = vadd.f32 %v794, %v796
        %801 = vrot.lane.b32.xlu0 %v797, 2
        %v802 = vpop.permute.xlu0 %801
        %803 = vrot.lane.b32.xlu0 %v798, 2
        %v804 = vpop.permute.xlu0 %803
        %v805 = vsel %vm292, %v802, %v804
        %807 = vst [vmem:[#allocation3 + $0x8] sm:$0xff] %v805
        %v808 = vld [vmem:[#allocation3] sm:$0xff]
        %v809 = vld [vmem:[#allocation3 + $0x8] sm:$0xff]
        %s810 = sld [smem:[#allocation4 + $0x2d]]
        %v811 = vstv %s810
        %v812 = vmul.f32 %v808, %v811
        %v813 = vmul.f32 %v809, %v811
        %s814 = sld [smem:[#allocation4 + $0x2e]]
        %v815 = vstv %s814
        %v816 = vmul.f32 %v808, %v815
        %v817 = vmul.f32 %v809, %v815
        %820 = vrot.lane.b32.xlu0 %v816, 127
        %v821 = vpop.permute.xlu0 %820
        %822 = vrot.lane.b32.xlu0 %v817, 127
        %v823 = vpop.permute.xlu0 %822
        %v824 = vsel %vm235, %v821, %v823
        %v827 = vadd.f32 %v812, %v824
        %v828 = vadd.f32 %v813, %v823
        %s829 = sld [smem:[#allocation4 + $0x2f]]
        %v830 = vstv %s829
        %v831 = vmul.f32 %v809, %v830
        %833 = vrot.lane.b32.xlu0 %v831, 126
        %v834 = vpop.permute.xlu0 %833
        %v836 = vadd.f32 %v827, %v834
        %v837 = vadd.f32 %v828, %v834
        %v838 = vld [vmem:[#allocation3 + $0x8] sm:$0xff]
        %v839 = vld [vmem:[#allocation3 + $0x10] sm:$0xff]
        %s840 = sld [smem:[#allocation4 + $0x30]]
        %v841 = vstv %s840
        %v842 = vmul.f32 %v838, %v841
        %v843 = vmul.f32 %v839, %v841
        %846 = vrot.lane.b32.xlu0 %v842, 125
        %v847 = vpop.permute.xlu0 %846
        %848 = vrot.lane.b32.xlu0 %v843, 125
        %v849 = vpop.permute.xlu0 %848
        %v850 = vsel %vm260, %v847, %v849
        %v853 = vadd.f32 %v836, %v847
        %v854 = vadd.f32 %v837, %v850
        %s855 = sld [smem:[#allocation4 + $0x31]]
        %v856 = vstv %s855
        %v857 = vmul.f32 %v838, %v856
        %v858 = vmul.f32 %v839, %v856
        %861 = vrot.lane.b32.xlu0 %v857, 124
        %v862 = vpop.permute.xlu0 %861
        %863 = vrot.lane.b32.xlu0 %v858, 124
        %v864 = vpop.permute.xlu0 %863
        %v865 = vsel %vm276, %v862, %v864
        %v868 = vadd.f32 %v853, %v862
        %v869 = vadd.f32 %v854, %v865
        %s870 = sld [smem:[#allocation8 + $0x9]]
        %v871 = vstv %s870
        %v872 = vadd.f32 %v868, %v871
        %v873 = vadd.f32 %v869, %v871
        %876 = vrot.lane.b32.xlu0 %v872, 2
        %v877 = vpop.permute.xlu0 %876
        %878 = vrot.lane.b32.xlu0 %v873, 2
        %v879 = vpop.permute.xlu0 %878
        %v880 = vsel %vm292, %v877, %v879
        %s882 = scalar_lea.vmem %s208, 40 [#allocation11]
        %883 = vst [vmem:[%s882] sm:$0xff] %v880
        %s884 = sld [smem:[#allocation4 + $0x41]]
        %v885 = vstv %s884
        %v886 = vmul.f32 %v217, %v885
        %v887 = vmul.f32 %v218, %v885
        %s888 = sld [smem:[#allocation4 + $0x42]]
        %v889 = vstv %s888
        %v890 = vmul.f32 %v217, %v889
        %v891 = vmul.f32 %v218, %v889
        %894 = vrot.lane.b32.xlu0 %v890, 127
        %v895 = vpop.permute.xlu0 %894
        %896 = vrot.lane.b32.xlu0 %v891, 127
        %v897 = vpop.permute.xlu0 %896
        %v898 = vsel %vm235, %v895, %v897
        %v901 = vadd.f32 %v886, %v898
        %v902 = vadd.f32 %v887, %v897
        %s903 = sld [smem:[#allocation4 + $0x43]]
        %v904 = vstv %s903
        %v905 = vmul.f32 %v218, %v904
        %907 = vrot.lane.b32.xlu0 %v905, 126
        %v908 = vpop.permute.xlu0 %907
        %v910 = vadd.f32 %v901, %v908
        %v911 = vadd.f32 %v902, %v908
        %s912 = sld [smem:[#allocation4 + $0x44]]
        %v913 = vstv %s912
        %v914 = vmul.f32 %v219, %v913
        %v915 = vmul.f32 %v220, %v913
        %918 = vrot.lane.b32.xlu0 %v914, 125
        %v919 = vpop.permute.xlu0 %918
        %920 = vrot.lane.b32.xlu0 %v915, 125
        %v921 = vpop.permute.xlu0 %920
        %v922 = vsel %vm260, %v919, %v921
        %v925 = vadd.f32 %v910, %v919
        %v926 = vadd.f32 %v911, %v922
        %s927 = sld [smem:[#allocation4 + $0x45]]
        %v928 = vstv %s927
        %v929 = vmul.f32 %v219, %v928
        %v930 = vmul.f32 %v220, %v928
        %933 = vrot.lane.b32.xlu0 %v929, 124
        %v934 = vpop.permute.xlu0 %933
        %935 = vrot.lane.b32.xlu0 %v930, 124
        %v936 = vpop.permute.xlu0 %935
        %v937 = vsel %vm276, %v934, %v936
        %v940 = vadd.f32 %v925, %v934
        %v941 = vadd.f32 %v926, %v937
        %s942 = sld [smem:[#allocation8 + $0xd]]
        %v943 = vstv %s942
        %v944 = vadd.f32 %v940, %v943
        %v945 = vadd.f32 %v941, %v943
        %948 = vrot.lane.b32.xlu0 %v944, 2
        %v949 = vpop.permute.xlu0 %948
        %950 = vrot.lane.b32.xlu0 %v945, 2
        %v951 = vpop.permute.xlu0 %950
        %v952 = vsel %vm292, %v949, %v951
        %954 = vst [vmem:[#allocation3 + $0x8] sm:$0xff] %v952
        %v955 = vld [vmem:[#allocation3] sm:$0xff]
        %v956 = vld [vmem:[#allocation3 + $0x8] sm:$0xff]
        %s957 = sld [smem:[#allocation4 + $0x55]]
        %v958 = vstv %s957
        %v959 = vmul.f32 %v955, %v958
        %v960 = vmul.f32 %v956, %v958
        %s961 = sld [smem:[#allocation4 + $0x56]]
        %v962 = vstv %s961
        %v963 = vmul.f32 %v955, %v962
        %v964 = vmul.f32 %v956, %v962
        %967 = vrot.lane.b32.xlu0 %v963, 127
        %v968 = vpop.permute.xlu0 %967
        %969 = vrot.lane.b32.xlu0 %v964, 127
        %v970 = vpop.permute.xlu0 %969
        %v971 = vsel %vm235, %v968, %v970
        %v974 = vadd.f32 %v959, %v971
        %v975 = vadd.f32 %v960, %v970
        %s976 = sld [smem:[#allocation4 + $0x57]]
        %v977 = vstv %s976
        %v978 = vmul.f32 %v956, %v977
        %980 = vrot.lane.b32.xlu0 %v978, 126
        %v981 = vpop.permute.xlu0 %980
        %v983 = vadd.f32 %v974, %v981
        %v984 = vadd.f32 %v975, %v981
        %v985 = vld [vmem:[#allocation3 + $0x8] sm:$0xff]
        %v986 = vld [vmem:[#allocation3 + $0x10] sm:$0xff]
        %s987 = sld [smem:[#allocation4 + $0x58]]
        %v988 = vstv %s987
        %v989 = vmul.f32 %v985, %v988
        %v990 = vmul.f32 %v986, %v988
        %993 = vrot.lane.b32.xlu0 %v989, 125
        %v994 = vpop.permute.xlu0 %993
        %995 = vrot.lane.b32.xlu0 %v990, 125
        %v996 = vpop.permute.xlu0 %995
        %v997 = vsel %vm260, %v994, %v996
        %v1000 = vadd.f32 %v983, %v994
        %v1001 = vadd.f32 %v984, %v997
        %s1002 = sld [smem:[#allocation4 + $0x59]]
        %v1003 = vstv %s1002
        %v1004 = vmul.f32 %v985, %v1003
        %v1005 = vmul.f32 %v986, %v1003
        %1008 = vrot.lane.b32.xlu0 %v1004, 124
        %v1009 = vpop.permute.xlu0 %1008
        %1010 = vrot.lane.b32.xlu0 %v1005, 124
        %v1011 = vpop.permute.xlu0 %1010
        %v1012 = vsel %vm276, %v1009, %v1011
        %v1015 = vadd.f32 %v1000, %v1009
        %v1016 = vadd.f32 %v1001, %v1012
        %s1017 = sld [smem:[#allocation8 + $0x11]]
        %v1018 = vstv %s1017
        %v1019 = vadd.f32 %v1015, %v1018
        %v1020 = vadd.f32 %v1016, %v1018
        %1023 = vrot.lane.b32.xlu0 %v1019, 2
        %v1024 = vpop.permute.xlu0 %1023
        %1025 = vrot.lane.b32.xlu0 %v1020, 2
        %v1026 = vpop.permute.xlu0 %1025
        %v1027 = vsel %vm292, %v1024, %v1026
        %1029 = vst [vmem:[#allocation3 + $0x8] sm:$0xff] %v1027
        %v1030 = vld [vmem:[#allocation3] sm:$0xff]
        %v1031 = vld [vmem:[#allocation3 + $0x8] sm:$0xff]
        %s1032 = sld [smem:[#allocation4 + $0x69]]
        %v1033 = vstv %s1032
        %v1034 = vmul.f32 %v1030, %v1033
        %v1035 = vmul.f32 %v1031, %v1033
        %s1036 = sld [smem:[#allocation4 + $0x6a]]
        %v1037 = vstv %s1036
        %v1038 = vmul.f32 %v1030, %v1037
        %v1039 = vmul.f32 %v1031, %v1037
        %1042 = vrot.lane.b32.xlu0 %v1038, 127
        %v1043 = vpop.permute.xlu0 %1042
        %1044 = vrot.lane.b32.xlu0 %v1039, 127
        %v1045 = vpop.permute.xlu0 %1044
        %v1046 = vsel %vm235, %v1043, %v1045
        %v1049 = vadd.f32 %v1034, %v1046
        %v1050 = vadd.f32 %v1035, %v1045
        %s1051 = sld [smem:[#allocation4 + $0x6b]]
        %v1052 = vstv %s1051
        %v1053 = vmul.f32 %v1031, %v1052
        %1055 = vrot.lane.b32.xlu0 %v1053, 126
        %v1056 = vpop.permute.xlu0 %1055
        %v1058 = vadd.f32 %v1049, %v1056
        %v1059 = vadd.f32 %v1050, %v1056
        %v1060 = vld [vmem:[#allocation3 + $0x8] sm:$0xff]
        %v1061 = vld [vmem:[#allocation3 + $0x10] sm:$0xff]
        %s1062 = sld [smem:[#allocation4 + $0x6c]]
        %v1063 = vstv %s1062
        %v1064 = vmul.f32 %v1060, %v1063
        %v1065 = vmul.f32 %v1061, %v1063
        %1068 = vrot.lane.b32.xlu0 %v1064, 125
        %v1069 = vpop.permute.xlu0 %1068
        %1070 = vrot.lane.b32.xlu0 %v1065, 125
        %v1071 = vpop.permute.xlu0 %1070
        %v1072 = vsel %vm260, %v1069, %v1071
        %v1075 = vadd.f32 %v1058, %v1069
        %v1076 = vadd.f32 %v1059, %v1072
        %s1077 = sld [smem:[#allocation4 + $0x6d]]
        %v1078 = vstv %s1077
        %v1079 = vmul.f32 %v1060, %v1078
        %v1080 = vmul.f32 %v1061, %v1078
        %1083 = vrot.lane.b32.xlu0 %v1079, 124
        %v1084 = vpop.permute.xlu0 %1083
        %1085 = vrot.lane.b32.xlu0 %v1080, 124
        %v1086 = vpop.permute.xlu0 %1085
        %v1087 = vsel %vm276, %v1084, %v1086
        %v1090 = vadd.f32 %v1075, %v1084
        %v1091 = vadd.f32 %v1076, %v1087
        %s1092 = sld [smem:[#allocation8 + $0x15]]
        %v1093 = vstv %s1092
        %v1094 = vadd.f32 %v1090, %v1093
        %v1095 = vadd.f32 %v1091, %v1093
        %1098 = vrot.lane.b32.xlu0 %v1094, 2
        %v1099 = vpop.permute.xlu0 %1098
        %1100 = vrot.lane.b32.xlu0 %v1095, 2
        %v1101 = vpop.permute.xlu0 %1100
        %v1102 = vsel %vm292, %v1099, %v1101
        %s1104 = scalar_lea.vmem %s208, 72 [#allocation11]
        %1105 = vst [vmem:[%s1104] sm:$0xff] %v1102
        %s1106 = sld [smem:[#allocation4 + $0xa]]
        %v1107 = vstv %s1106
        %v1108 = vmul.f32 %v217, %v1107
        %v1109 = vmul.f32 %v218, %v1107
        %s1110 = sld [smem:[#allocation4 + $0xb]]
        %v1111 = vstv %s1110
        %v1112 = vmul.f32 %v217, %v1111
        %v1113 = vmul.f32 %v218, %v1111
        %1116 = vrot.lane.b32.xlu0 %v1112, 127
        %v1117 = vpop.permute.xlu0 %1116
        %1118 = vrot.lane.b32.xlu0 %v1113, 127
        %v1119 = vpop.permute.xlu0 %1118
        %v1120 = vsel %vm235, %v1117, %v1119
        %v1123 = vadd.f32 %v1108, %v1120
        %v1124 = vadd.f32 %v1109, %v1119
        %s1125 = sld [smem:[#allocation4 + $0xc]]
        %v1126 = vstv %s1125
        %v1127 = vmul.f32 %v218, %v1126
        %1129 = vrot.lane.b32.xlu0 %v1127, 126
        %v1130 = vpop.permute.xlu0 %1129
        %v1132 = vadd.f32 %v1123, %v1130
        %v1133 = vadd.f32 %v1124, %v1130
        %s1134 = sld [smem:[#allocation4 + $0xd]]
        %v1135 = vstv %s1134
        %v1136 = vmul.f32 %v219, %v1135
        %v1137 = vmul.f32 %v220, %v1135
        %1140 = vrot.lane.b32.xlu0 %v1136, 125
        %v1141 = vpop.permute.xlu0 %1140
        %1142 = vrot.lane.b32.xlu0 %v1137, 125
        %v1143 = vpop.permute.xlu0 %1142
        %v1144 = vsel %vm260, %v1141, %v1143
        %v1147 = vadd.f32 %v1132, %v1141
        %v1148 = vadd.f32 %v1133, %v1144
        %s1149 = sld [smem:[#allocation4 + $0xe]]
        %v1150 = vstv %s1149
        %v1151 = vmul.f32 %v219, %v1150
        %v1152 = vmul.f32 %v220, %v1150
        %1155 = vrot.lane.b32.xlu0 %v1151, 124
        %v1156 = vpop.permute.xlu0 %1155
        %1157 = vrot.lane.b32.xlu0 %v1152, 124
        %v1158 = vpop.permute.xlu0 %1157
        %v1159 = vsel %vm276, %v1156, %v1158
        %v1162 = vadd.f32 %v1147, %v1156
        %v1163 = vadd.f32 %v1148, %v1159
        %s1164 = sld [smem:[#allocation8 + $0x2]]
        %v1165 = vstv %s1164
        %v1166 = vadd.f32 %v1162, %v1165
        %v1167 = vadd.f32 %v1163, %v1165
        %1170 = vrot.lane.b32.xlu0 %v1166, 2
        %v1171 = vpop.permute.xlu0 %1170
        %1172 = vrot.lane.b32.xlu0 %v1167, 2
        %v1173 = vpop.permute.xlu0 %1172
        %v1174 = vsel %vm292, %v1171, %v1173
        %s1176 = scalar_lea.vmem %s208, 16 [#allocation11]
        %1177 = vst [vmem:[%s1176] sm:$0xff] %v1174
        %s1178 = sld [smem:[#allocation4 + $0x1e]]
        %v1179 = vstv %s1178
        %v1180 = vmul.f32 %v217, %v1179
        %v1181 = vmul.f32 %v218, %v1179
        %s1182 = sld [smem:[#allocation4 + $0x1f]]
        %v1183 = vstv %s1182
        %v1184 = vmul.f32 %v217, %v1183
        %v1185 = vmul.f32 %v218, %v1183
        %1188 = vrot.lane.b32.xlu0 %v1184, 127
        %v1189 = vpop.permute.xlu0 %1188
        %1190 = vrot.lane.b32.xlu0 %v1185, 127
        %v1191 = vpop.permute.xlu0 %1190
        %v1192 = vsel %vm235, %v1189, %v1191
        %v1195 = vadd.f32 %v1180, %v1192
        %v1196 = vadd.f32 %v1181, %v1191
        %s1197 = sld [smem:[#allocation4 + $0x20]]
        %v1198 = vstv %s1197
        %v1199 = vmul.f32 %v218, %v1198
        %1201 = vrot.lane.b32.xlu0 %v1199, 126
        %v1202 = vpop.permute.xlu0 %1201
        %v1204 = vadd.f32 %v1195, %v1202
        %v1205 = vadd.f32 %v1196, %v1202
        %s1206 = sld [smem:[#allocation4 + $0x21]]
        %v1207 = vstv %s1206
        %v1208 = vmul.f32 %v219, %v1207
        %v1209 = vmul.f32 %v220, %v1207
        %1212 = vrot.lane.b32.xlu0 %v1208, 125
        %v1213 = vpop.permute.xlu0 %1212
        %1214 = vrot.lane.b32.xlu0 %v1209, 125
        %v1215 = vpop.permute.xlu0 %1214
        %v1216 = vsel %vm260, %v1213, %v1215
        %v1219 = vadd.f32 %v1204, %v1213
        %v1220 = vadd.f32 %v1205, %v1216
        %s1221 = sld [smem:[#allocation4 + $0x22]]
        %v1222 = vstv %s1221
        %v1223 = vmul.f32 %v219, %v1222
        %v1224 = vmul.f32 %v220, %v1222
        %1227 = vrot.lane.b32.xlu0 %v1223, 124
        %v1228 = vpop.permute.xlu0 %1227
        %1229 = vrot.lane.b32.xlu0 %v1224, 124
        %v1230 = vpop.permute.xlu0 %1229
        %v1231 = vsel %vm276, %v1228, %v1230
        %v1234 = vadd.f32 %v1219, %v1228
        %v1235 = vadd.f32 %v1220, %v1231
        %s1236 = sld [smem:[#allocation8 + $0x6]]
        %v1237 = vstv %s1236
        %v1238 = vadd.f32 %v1234, %v1237
        %v1239 = vadd.f32 %v1235, %v1237
        %1242 = vrot.lane.b32.xlu0 %v1238, 2
        %v1243 = vpop.permute.xlu0 %1242
        %1244 = vrot.lane.b32.xlu0 %v1239, 2
        %v1245 = vpop.permute.xlu0 %1244
        %v1246 = vsel %vm292, %v1243, %v1245
        %1248 = vst [vmem:[#allocation3 + $0x8] sm:$0xff] %v1246
        %v1249 = vld [vmem:[#allocation3] sm:$0xff]
        %v1250 = vld [vmem:[#allocation3 + $0x8] sm:$0xff]
        %s1251 = sld [smem:[#allocation4 + $0x32]]
        %v1252 = vstv %s1251
        %v1253 = vmul.f32 %v1249, %v1252
        %v1254 = vmul.f32 %v1250, %v1252
        %s1255 = sld [smem:[#allocation4 + $0x33]]
        %v1256 = vstv %s1255
        %v1257 = vmul.f32 %v1249, %v1256
        %v1258 = vmul.f32 %v1250, %v1256
        %1261 = vrot.lane.b32.xlu0 %v1257, 127
        %v1262 = vpop.permute.xlu0 %1261
        %1263 = vrot.lane.b32.xlu0 %v1258, 127
        %v1264 = vpop.permute.xlu0 %1263
        %v1265 = vsel %vm235, %v1262, %v1264
        %v1268 = vadd.f32 %v1253, %v1265
        %v1269 = vadd.f32 %v1254, %v1264
        %s1270 = sld [smem:[#allocation4 + $0x34]]
        %v1271 = vstv %s1270
        %v1272 = vmul.f32 %v1250, %v1271
        %1274 = vrot.lane.b32.xlu0 %v1272, 126
        %v1275 = vpop.permute.xlu0 %1274
        %v1277 = vadd.f32 %v1268, %v1275
        %v1278 = vadd.f32 %v1269, %v1275
        %v1279 = vld [vmem:[#allocation3 + $0x8] sm:$0xff]
        %v1280 = vld [vmem:[#allocation3 + $0x10] sm:$0xff]
        %s1281 = sld [smem:[#allocation4 + $0x35]]
        %v1282 = vstv %s1281
        %v1283 = vmul.f32 %v1279, %v1282
        %v1284 = vmul.f32 %v1280, %v1282
        %1287 = vrot.lane.b32.xlu0 %v1283, 125
        %v1288 = vpop.permute.xlu0 %1287
        %1289 = vrot.lane.b32.xlu0 %v1284, 125
        %v1290 = vpop.permute.xlu0 %1289
        %v1291 = vsel %vm260, %v1288, %v1290
        %v1294 = vadd.f32 %v1277, %v1288
        %v1295 = vadd.f32 %v1278, %v1291
        %s1296 = sld [smem:[#allocation4 + $0x36]]
        %v1297 = vstv %s1296
        %v1298 = vmul.f32 %v1279, %v1297
        %v1299 = vmul.f32 %v1280, %v1297
        %1302 = vrot.lane.b32.xlu0 %v1298, 124
        %v1303 = vpop.permute.xlu0 %1302
        %1304 = vrot.lane.b32.xlu0 %v1299, 124
        %v1305 = vpop.permute.xlu0 %1304
        %v1306 = vsel %vm276, %v1303, %v1305
        %v1309 = vadd.f32 %v1294, %v1303
        %v1310 = vadd.f32 %v1295, %v1306
        %s1311 = sld [smem:[#allocation8 + $0xa]]
        %v1312 = vstv %s1311
        %v1313 = vadd.f32 %v1309, %v1312
        %v1314 = vadd.f32 %v1310, %v1312
        %1317 = vrot.lane.b32.xlu0 %v1313, 2
        %v1318 = vpop.permute.xlu0 %1317
        %1319 = vrot.lane.b32.xlu0 %v1314, 2
        %v1320 = vpop.permute.xlu0 %1319
        %v1321 = vsel %vm292, %v1318, %v1320
        %s1323 = scalar_lea.vmem %s208, 48 [#allocation11]
        %1324 = vst [vmem:[%s1323] sm:$0xff] %v1321
        %s1325 = sld [smem:[#allocation4 + $0x46]]
        %v1326 = vstv %s1325
        %v1327 = vmul.f32 %v217, %v1326
        %v1328 = vmul.f32 %v218, %v1326
        %s1329 = sld [smem:[#allocation4 + $0x47]]
        %v1330 = vstv %s1329
        %v1331 = vmul.f32 %v217, %v1330
        %v1332 = vmul.f32 %v218, %v1330
        %1335 = vrot.lane.b32.xlu0 %v1331, 127
        %v1336 = vpop.permute.xlu0 %1335
        %1337 = vrot.lane.b32.xlu0 %v1332, 127
        %v1338 = vpop.permute.xlu0 %1337
        %v1339 = vsel %vm235, %v1336, %v1338
        %v1342 = vadd.f32 %v1327, %v1339
        %v1343 = vadd.f32 %v1328, %v1338
        %s1344 = sld [smem:[#allocation4 + $0x48]]
        %v1345 = vstv %s1344
        %v1346 = vmul.f32 %v218, %v1345
        %1348 = vrot.lane.b32.xlu0 %v1346, 126
        %v1349 = vpop.permute.xlu0 %1348
        %v1351 = vadd.f32 %v1342, %v1349
        %v1352 = vadd.f32 %v1343, %v1349
        %s1353 = sld [smem:[#allocation4 + $0x49]]
        %v1354 = vstv %s1353
        %v1355 = vmul.f32 %v219, %v1354
        %v1356 = vmul.f32 %v220, %v1354
        %1359 = vrot.lane.b32.xlu0 %v1355, 125
        %v1360 = vpop.permute.xlu0 %1359
        %1361 = vrot.lane.b32.xlu0 %v1356, 125
        %v1362 = vpop.permute.xlu0 %1361
        %v1363 = vsel %vm260, %v1360, %v1362
        %v1366 = vadd.f32 %v1351, %v1360
        %v1367 = vadd.f32 %v1352, %v1363
        %s1368 = sld [smem:[#allocation4 + $0x4a]]
        %v1369 = vstv %s1368
        %v1370 = vmul.f32 %v219, %v1369
        %v1371 = vmul.f32 %v220, %v1369
        %1374 = vrot.lane.b32.xlu0 %v1370, 124
        %v1375 = vpop.permute.xlu0 %1374
        %1376 = vrot.lane.b32.xlu0 %v1371, 124
        %v1377 = vpop.permute.xlu0 %1376
        %v1378 = vsel %vm276, %v1375, %v1377
        %v1381 = vadd.f32 %v1366, %v1375
        %v1382 = vadd.f32 %v1367, %v1378
        %s1383 = sld [smem:[#allocation8 + $0xe]]
        %v1384 = vstv %s1383
        %v1385 = vadd.f32 %v1381, %v1384
        %v1386 = vadd.f32 %v1382, %v1384
        %1389 = vrot.lane.b32.xlu0 %v1385, 2
        %v1390 = vpop.permute.xlu0 %1389
        %1391 = vrot.lane.b32.xlu0 %v1386, 2
        %v1392 = vpop.permute.xlu0 %1391
        %v1393 = vsel %vm292, %v1390, %v1392
        %1395 = vst [vmem:[#allocation3 + $0x8] sm:$0xff] %v1393
        %v1396 = vld [vmem:[#allocation3] sm:$0xff]
        %v1397 = vld [vmem:[#allocation3 + $0x8] sm:$0xff]
        %s1398 = sld [smem:[#allocation4 + $0x5a]]
        %v1399 = vstv %s1398
        %v1400 = vmul.f32 %v1396, %v1399
        %v1401 = vmul.f32 %v1397, %v1399
        %s1402 = sld [smem:[#allocation4 + $0x5b]]
        %v1403 = vstv %s1402
        %v1404 = vmul.f32 %v1396, %v1403
        %v1405 = vmul.f32 %v1397, %v1403
        %1408 = vrot.lane.b32.xlu0 %v1404, 127
        %v1409 = vpop.permute.xlu0 %1408
        %1410 = vrot.lane.b32.xlu0 %v1405, 127
        %v1411 = vpop.permute.xlu0 %1410
        %v1412 = vsel %vm235, %v1409, %v1411
        %v1415 = vadd.f32 %v1400, %v1412
        %v1416 = vadd.f32 %v1401, %v1411
        %s1417 = sld [smem:[#allocation4 + $0x5c]]
        %v1418 = vstv %s1417
        %v1419 = vmul.f32 %v1397, %v1418
        %1421 = vrot.lane.b32.xlu0 %v1419, 126
        %v1422 = vpop.permute.xlu0 %1421
        %v1424 = vadd.f32 %v1415, %v1422
        %v1425 = vadd.f32 %v1416, %v1422
        %v1426 = vld [vmem:[#allocation3 + $0x8] sm:$0xff]
        %v1427 = vld [vmem:[#allocation3 + $0x10] sm:$0xff]
        %s1428 = sld [smem:[#allocation4 + $0x5d]]
        %v1429 = vstv %s1428
        %v1430 = vmul.f32 %v1426, %v1429
        %v1431 = vmul.f32 %v1427, %v1429
        %1434 = vrot.lane.b32.xlu0 %v1430, 125
        %v1435 = vpop.permute.xlu0 %1434
        %1436 = vrot.lane.b32.xlu0 %v1431, 125
        %v1437 = vpop.permute.xlu0 %1436
        %v1438 = vsel %vm260, %v1435, %v1437
        %v1441 = vadd.f32 %v1424, %v1435
        %v1442 = vadd.f32 %v1425, %v1438
        %s1443 = sld [smem:[#allocation4 + $0x5e]]
        %v1444 = vstv %s1443
        %v1445 = vmul.f32 %v1426, %v1444
        %v1446 = vmul.f32 %v1427, %v1444
        %1449 = vrot.lane.b32.xlu0 %v1445, 124
        %v1450 = vpop.permute.xlu0 %1449
        %1451 = vrot.lane.b32.xlu0 %v1446, 124
        %v1452 = vpop.permute.xlu0 %1451
        %v1453 = vsel %vm276, %v1450, %v1452
        %v1456 = vadd.f32 %v1441, %v1450
        %v1457 = vadd.f32 %v1442, %v1453
        %s1458 = sld [smem:[#allocation8 + $0x12]]
        %v1459 = vstv %s1458
        %v1460 = vadd.f32 %v1456, %v1459
        %v1461 = vadd.f32 %v1457, %v1459
        %1464 = vrot.lane.b32.xlu0 %v1460, 2
        %v1465 = vpop.permute.xlu0 %1464
        %1466 = vrot.lane.b32.xlu0 %v1461, 2
        %v1467 = vpop.permute.xlu0 %1466
        %v1468 = vsel %vm292, %v1465, %v1467
        %1470 = vst [vmem:[#allocation3 + $0x8] sm:$0xff] %v1468
        %v1471 = vld [vmem:[#allocation3] sm:$0xff]
        %v1472 = vld [vmem:[#allocation3 + $0x8] sm:$0xff]
        %s1473 = sld [smem:[#allocation4 + $0x6e]]
        %v1474 = vstv %s1473
        %v1475 = vmul.f32 %v1471, %v1474
        %v1476 = vmul.f32 %v1472, %v1474
        %s1477 = sld [smem:[#allocation4 + $0x6f]]
        %v1478 = vstv %s1477
        %v1479 = vmul.f32 %v1471, %v1478
        %v1480 = vmul.f32 %v1472, %v1478
        %1483 = vrot.lane.b32.xlu0 %v1479, 127
        %v1484 = vpop.permute.xlu0 %1483
        %1485 = vrot.lane.b32.xlu0 %v1480, 127
        %v1486 = vpop.permute.xlu0 %1485
        %v1487 = vsel %vm235, %v1484, %v1486
        %v1490 = vadd.f32 %v1475, %v1487
        %v1491 = vadd.f32 %v1476, %v1486
        %s1492 = sld [smem:[#allocation4 + $0x70]]
        %v1493 = vstv %s1492
        %v1494 = vmul.f32 %v1472, %v1493
        %1496 = vrot.lane.b32.xlu0 %v1494, 126
        %v1497 = vpop.permute.xlu0 %1496
        %v1499 = vadd.f32 %v1490, %v1497
        %v1500 = vadd.f32 %v1491, %v1497
        %v1501 = vld [vmem:[#allocation3 + $0x8] sm:$0xff]
        %v1502 = vld [vmem:[#allocation3 + $0x10] sm:$0xff]
        %s1503 = sld [smem:[#allocation4 + $0x71]]
        %v1504 = vstv %s1503
        %v1505 = vmul.f32 %v1501, %v1504
        %v1506 = vmul.f32 %v1502, %v1504
        %1509 = vrot.lane.b32.xlu0 %v1505, 125
        %v1510 = vpop.permute.xlu0 %1509
        %1511 = vrot.lane.b32.xlu0 %v1506, 125
        %v1512 = vpop.permute.xlu0 %1511
        %v1513 = vsel %vm260, %v1510, %v1512
        %v1516 = vadd.f32 %v1499, %v1510
        %v1517 = vadd.f32 %v1500, %v1513
        %s1518 = sld [smem:[#allocation4 + $0x72]]
        %v1519 = vstv %s1518
        %v1520 = vmul.f32 %v1501, %v1519
        %v1521 = vmul.f32 %v1502, %v1519
        %1524 = vrot.lane.b32.xlu0 %v1520, 124
        %v1525 = vpop.permute.xlu0 %1524
        %1526 = vrot.lane.b32.xlu0 %v1521, 124
        %v1527 = vpop.permute.xlu0 %1526
        %v1528 = vsel %vm276, %v1525, %v1527
        %v1531 = vadd.f32 %v1516, %v1525
        %v1532 = vadd.f32 %v1517, %v1528
        %s1533 = sld [smem:[#allocation8 + $0x16]]
        %v1534 = vstv %s1533
        %v1535 = vadd.f32 %v1531, %v1534
        %v1536 = vadd.f32 %v1532, %v1534
        %1539 = vrot.lane.b32.xlu0 %v1535, 2
        %v1540 = vpop.permute.xlu0 %1539
        %1541 = vrot.lane.b32.xlu0 %v1536, 2
        %v1542 = vpop.permute.xlu0 %1541
        %v1543 = vsel %vm292, %v1540, %v1542
        %s1545 = scalar_lea.vmem %s208, 80 [#allocation11]
        %1546 = vst [vmem:[%s1545] sm:$0xff] %v1543
        %s1547 = sld [smem:[#allocation4 + $0xf]]
        %v1548 = vstv %s1547
        %v1549 = vmul.f32 %v217, %v1548
        %v1550 = vmul.f32 %v218, %v1548
        %s1551 = sld [smem:[#allocation4 + $0x10]]
        %v1552 = vstv %s1551
        %v1553 = vmul.f32 %v217, %v1552
        %v1554 = vmul.f32 %v218, %v1552
        %1557 = vrot.lane.b32.xlu0 %v1553, 127
        %v1558 = vpop.permute.xlu0 %1557
        %1559 = vrot.lane.b32.xlu0 %v1554, 127
        %v1560 = vpop.permute.xlu0 %1559
        %v1561 = vsel %vm235, %v1558, %v1560
        %v1564 = vadd.f32 %v1549, %v1561
        %v1565 = vadd.f32 %v1550, %v1560
        %s1566 = sld [smem:[#allocation4 + $0x11]]
        %v1567 = vstv %s1566
        %v1568 = vmul.f32 %v218, %v1567
        %1570 = vrot.lane.b32.xlu0 %v1568, 126
        %v1571 = vpop.permute.xlu0 %1570
        %v1573 = vadd.f32 %v1564, %v1571
        %v1574 = vadd.f32 %v1565, %v1571
        %s1575 = sld [smem:[#allocation4 + $0x12]]
        %v1576 = vstv %s1575
        %v1577 = vmul.f32 %v219, %v1576
        %v1578 = vmul.f32 %v220, %v1576
        %1581 = vrot.lane.b32.xlu0 %v1577, 125
        %v1582 = vpop.permute.xlu0 %1581
        %1583 = vrot.lane.b32.xlu0 %v1578, 125
        %v1584 = vpop.permute.xlu0 %1583
        %v1585 = vsel %vm260, %v1582, %v1584
        %v1588 = vadd.f32 %v1573, %v1582
        %v1589 = vadd.f32 %v1574, %v1585
        %s1590 = sld [smem:[#allocation4 + $0x13]]
        %v1591 = vstv %s1590
        %v1592 = vmul.f32 %v219, %v1591
        %v1593 = vmul.f32 %v220, %v1591
        %1596 = vrot.lane.b32.xlu0 %v1592, 124
        %v1597 = vpop.permute.xlu0 %1596
        %1598 = vrot.lane.b32.xlu0 %v1593, 124
        %v1599 = vpop.permute.xlu0 %1598
        %v1600 = vsel %vm276, %v1597, %v1599
        %v1603 = vadd.f32 %v1588, %v1597
        %v1604 = vadd.f32 %v1589, %v1600
        %s1605 = sld [smem:[#allocation8 + $0x3]]
        %v1606 = vstv %s1605
        %v1607 = vadd.f32 %v1603, %v1606
        %v1608 = vadd.f32 %v1604, %v1606
        %1611 = vrot.lane.b32.xlu0 %v1607, 2
        %v1612 = vpop.permute.xlu0 %1611
        %1613 = vrot.lane.b32.xlu0 %v1608, 2
        %v1614 = vpop.permute.xlu0 %1613
        %v1615 = vsel %vm292, %v1612, %v1614
        %s1617 = scalar_lea.vmem %s208, 24 [#allocation11]
        %1618 = vst [vmem:[%s1617] sm:$0xff] %v1615
        %s1619 = sld [smem:[#allocation4 + $0x23]]
        %v1620 = vstv %s1619
        %v1621 = vmul.f32 %v217, %v1620
        %v1622 = vmul.f32 %v218, %v1620
        %s1623 = sld [smem:[#allocation4 + $0x24]]
        %v1624 = vstv %s1623
        %v1625 = vmul.f32 %v217, %v1624
        %v1626 = vmul.f32 %v218, %v1624
        %1629 = vrot.lane.b32.xlu0 %v1625, 127
        %v1630 = vpop.permute.xlu0 %1629
        %1631 = vrot.lane.b32.xlu0 %v1626, 127
        %v1632 = vpop.permute.xlu0 %1631
        %v1633 = vsel %vm235, %v1630, %v1632
        %v1636 = vadd.f32 %v1621, %v1633
        %v1637 = vadd.f32 %v1622, %v1632
        %s1638 = sld [smem:[#allocation4 + $0x25]]
        %v1639 = vstv %s1638
        %v1640 = vmul.f32 %v218, %v1639
        %1642 = vrot.lane.b32.xlu0 %v1640, 126
        %v1643 = vpop.permute.xlu0 %1642
        %v1645 = vadd.f32 %v1636, %v1643
        %v1646 = vadd.f32 %v1637, %v1643
        %s1647 = sld [smem:[#allocation4 + $0x26]]
        %v1648 = vstv %s1647
        %v1649 = vmul.f32 %v219, %v1648
        %v1650 = vmul.f32 %v220, %v1648
        %1653 = vrot.lane.b32.xlu0 %v1649, 125
        %v1654 = vpop.permute.xlu0 %1653
        %1655 = vrot.lane.b32.xlu0 %v1650, 125
        %v1656 = vpop.permute.xlu0 %1655
        %v1657 = vsel %vm260, %v1654, %v1656
        %v1660 = vadd.f32 %v1645, %v1654
        %v1661 = vadd.f32 %v1646, %v1657
        %s1662 = sld [smem:[#allocation4 + $0x27]]
        %v1663 = vstv %s1662
        %v1664 = vmul.f32 %v219, %v1663
        %v1665 = vmul.f32 %v220, %v1663
        %1668 = vrot.lane.b32.xlu0 %v1664, 124
        %v1669 = vpop.permute.xlu0 %1668
        %1670 = vrot.lane.b32.xlu0 %v1665, 124
        %v1671 = vpop.permute.xlu0 %1670
        %v1672 = vsel %vm276, %v1669, %v1671
        %v1675 = vadd.f32 %v1660, %v1669
        %v1676 = vadd.f32 %v1661, %v1672
        %s1677 = sld [smem:[#allocation8 + $0x7]]
        %v1678 = vstv %s1677
        %v1679 = vadd.f32 %v1675, %v1678
        %v1680 = vadd.f32 %v1676, %v1678
        %1683 = vrot.lane.b32.xlu0 %v1679, 2
        %v1684 = vpop.permute.xlu0 %1683
        %1685 = vrot.lane.b32.xlu0 %v1680, 2
        %v1686 = vpop.permute.xlu0 %1685
        %v1687 = vsel %vm292, %v1684, %v1686
        %1689 = vst [vmem:[#allocation3 + $0x8] sm:$0xff] %v1687
        %v1690 = vld [vmem:[#allocation3] sm:$0xff]
        %v1691 = vld [vmem:[#allocation3 + $0x8] sm:$0xff]
        %s1692 = sld [smem:[#allocation4 + $0x37]]
        %v1693 = vstv %s1692
        %v1694 = vmul.f32 %v1690, %v1693
        %v1695 = vmul.f32 %v1691, %v1693
        %s1696 = sld [smem:[#allocation4 + $0x38]]
        %v1697 = vstv %s1696
        %v1698 = vmul.f32 %v1690, %v1697
        %v1699 = vmul.f32 %v1691, %v1697
        %1702 = vrot.lane.b32.xlu0 %v1698, 127
        %v1703 = vpop.permute.xlu0 %1702
        %1704 = vrot.lane.b32.xlu0 %v1699, 127
        %v1705 = vpop.permute.xlu0 %1704
        %v1706 = vsel %vm235, %v1703, %v1705
        %v1709 = vadd.f32 %v1694, %v1706
        %v1710 = vadd.f32 %v1695, %v1705
        %s1711 = sld [smem:[#allocation4 + $0x39]]
        %v1712 = vstv %s1711
        %v1713 = vmul.f32 %v1691, %v1712
        %1715 = vrot.lane.b32.xlu0 %v1713, 126
        %v1716 = vpop.permute.xlu0 %1715
        %v1718 = vadd.f32 %v1709, %v1716
        %v1719 = vadd.f32 %v1710, %v1716
        %v1720 = vld [vmem:[#allocation3 + $0x8] sm:$0xff]
        %v1721 = vld [vmem:[#allocation3 + $0x10] sm:$0xff]
        %s1722 = sld [smem:[#allocation4 + $0x3a]]
        %v1723 = vstv %s1722
        %v1724 = vmul.f32 %v1720, %v1723
        %v1725 = vmul.f32 %v1721, %v1723
        %1728 = vrot.lane.b32.xlu0 %v1724, 125
        %v1729 = vpop.permute.xlu0 %1728
        %1730 = vrot.lane.b32.xlu0 %v1725, 125
        %v1731 = vpop.permute.xlu0 %1730
        %v1732 = vsel %vm260, %v1729, %v1731
        %v1735 = vadd.f32 %v1718, %v1729
        %v1736 = vadd.f32 %v1719, %v1732
        %s1737 = sld [smem:[#allocation4 + $0x3b]]
        %v1738 = vstv %s1737
        %v1739 = vmul.f32 %v1720, %v1738
        %v1740 = vmul.f32 %v1721, %v1738
        %1743 = vrot.lane.b32.xlu0 %v1739, 124
        %v1744 = vpop.permute.xlu0 %1743
        %1745 = vrot.lane.b32.xlu0 %v1740, 124
        %v1746 = vpop.permute.xlu0 %1745
        %v1747 = vsel %vm276, %v1744, %v1746
        %v1750 = vadd.f32 %v1735, %v1744
        %v1751 = vadd.f32 %v1736, %v1747
        %s1752 = sld [smem:[#allocation8 + $0xb]]
        %v1753 = vstv %s1752
        %v1754 = vadd.f32 %v1750, %v1753
        %v1755 = vadd.f32 %v1751, %v1753
        %1758 = vrot.lane.b32.xlu0 %v1754, 2
        %v1759 = vpop.permute.xlu0 %1758
        %1760 = vrot.lane.b32.xlu0 %v1755, 2
        %v1761 = vpop.permute.xlu0 %1760
        %v1762 = vsel %vm292, %v1759, %v1761
        %s1764 = scalar_lea.vmem %s208, 56 [#allocation11]
        %1765 = vst [vmem:[%s1764] sm:$0xff] %v1762
        %s1766 = sld [smem:[#allocation4 + $0x4b]]
        %v1767 = vstv %s1766
        %v1768 = vmul.f32 %v217, %v1767
        %v1769 = vmul.f32 %v218, %v1767
        %s1770 = sld [smem:[#allocation4 + $0x4c]]
        %v1771 = vstv %s1770
        %v1772 = vmul.f32 %v217, %v1771
        %v1773 = vmul.f32 %v218, %v1771
        %1776 = vrot.lane.b32.xlu0 %v1772, 127
        %v1777 = vpop.permute.xlu0 %1776
        %1778 = vrot.lane.b32.xlu0 %v1773, 127
        %v1779 = vpop.permute.xlu0 %1778
        %v1780 = vsel %vm235, %v1777, %v1779
        %v1783 = vadd.f32 %v1768, %v1780
        %v1784 = vadd.f32 %v1769, %v1779
        %s1785 = sld [smem:[#allocation4 + $0x4d]]
        %v1786 = vstv %s1785
        %v1787 = vmul.f32 %v218, %v1786
        %1789 = vrot.lane.b32.xlu0 %v1787, 126
        %v1790 = vpop.permute.xlu0 %1789
        %v1792 = vadd.f32 %v1783, %v1790
        %v1793 = vadd.f32 %v1784, %v1790
        %s1794 = sld [smem:[#allocation4 + $0x4e]]
        %v1795 = vstv %s1794
        %v1796 = vmul.f32 %v219, %v1795
        %v1797 = vmul.f32 %v220, %v1795
        %1800 = vrot.lane.b32.xlu0 %v1796, 125
        %v1801 = vpop.permute.xlu0 %1800
        %1802 = vrot.lane.b32.xlu0 %v1797, 125
        %v1803 = vpop.permute.xlu0 %1802
        %v1804 = vsel %vm260, %v1801, %v1803
        %v1807 = vadd.f32 %v1792, %v1801
        %v1808 = vadd.f32 %v1793, %v1804
        %s1809 = sld [smem:[#allocation4 + $0x4f]]
        %v1810 = vstv %s1809
        %v1811 = vmul.f32 %v219, %v1810
        %v1812 = vmul.f32 %v220, %v1810
        %1815 = vrot.lane.b32.xlu0 %v1811, 124
        %v1816 = vpop.permute.xlu0 %1815
        %1817 = vrot.lane.b32.xlu0 %v1812, 124
        %v1818 = vpop.permute.xlu0 %1817
        %v1819 = vsel %vm276, %v1816, %v1818
        %v1822 = vadd.f32 %v1807, %v1816
        %v1823 = vadd.f32 %v1808, %v1819
        %s1824 = sld [smem:[#allocation8 + $0xf]]
        %v1825 = vstv %s1824
        %v1826 = vadd.f32 %v1822, %v1825
        %v1827 = vadd.f32 %v1823, %v1825
        %1830 = vrot.lane.b32.xlu0 %v1826, 2
        %v1831 = vpop.permute.xlu0 %1830
        %1832 = vrot.lane.b32.xlu0 %v1827, 2
        %v1833 = vpop.permute.xlu0 %1832
        %v1834 = vsel %vm292, %v1831, %v1833
        %1836 = vst [vmem:[#allocation3 + $0x8] sm:$0xff] %v1834
        %v1837 = vld [vmem:[#allocation3] sm:$0xff]
        %v1838 = vld [vmem:[#allocation3 + $0x8] sm:$0xff]
        %s1839 = sld [smem:[#allocation4 + $0x5f]]
        %v1840 = vstv %s1839
        %v1841 = vmul.f32 %v1837, %v1840
        %v1842 = vmul.f32 %v1838, %v1840
        %s1843 = sld [smem:[#allocation4 + $0x60]]
        %v1844 = vstv %s1843
        %v1845 = vmul.f32 %v1837, %v1844
        %v1846 = vmul.f32 %v1838, %v1844
        %1849 = vrot.lane.b32.xlu0 %v1845, 127
        %v1850 = vpop.permute.xlu0 %1849
        %1851 = vrot.lane.b32.xlu0 %v1846, 127
        %v1852 = vpop.permute.xlu0 %1851
        %v1853 = vsel %vm235, %v1850, %v1852
        %v1856 = vadd.f32 %v1841, %v1853
        %v1857 = vadd.f32 %v1842, %v1852
        %s1858 = sld [smem:[#allocation4 + $0x61]]
        %v1859 = vstv %s1858
        %v1860 = vmul.f32 %v1838, %v1859
        %1862 = vrot.lane.b32.xlu0 %v1860, 126
        %v1863 = vpop.permute.xlu0 %1862
        %v1865 = vadd.f32 %v1856, %v1863
        %v1866 = vadd.f32 %v1857, %v1863
        %v1867 = vld [vmem:[#allocation3 + $0x8] sm:$0xff]
        %v1868 = vld [vmem:[#allocation3 + $0x10] sm:$0xff]
        %s1869 = sld [smem:[#allocation4 + $0x62]]
        %v1870 = vstv %s1869
        %v1871 = vmul.f32 %v1867, %v1870
        %v1872 = vmul.f32 %v1868, %v1870
        %1875 = vrot.lane.b32.xlu0 %v1871, 125
        %v1876 = vpop.permute.xlu0 %1875
        %1877 = vrot.lane.b32.xlu0 %v1872, 125
        %v1878 = vpop.permute.xlu0 %1877
        %v1879 = vsel %vm260, %v1876, %v1878
        %v1882 = vadd.f32 %v1865, %v1876
        %v1883 = vadd.f32 %v1866, %v1879
        %s1884 = sld [smem:[#allocation4 + $0x63]]
        %v1885 = vstv %s1884
        %v1886 = vmul.f32 %v1867, %v1885
        %v1887 = vmul.f32 %v1868, %v1885
        %1890 = vrot.lane.b32.xlu0 %v1886, 124
        %v1891 = vpop.permute.xlu0 %1890
        %1892 = vrot.lane.b32.xlu0 %v1887, 124
        %v1893 = vpop.permute.xlu0 %1892
        %v1894 = vsel %vm276, %v1891, %v1893
        %v1897 = vadd.f32 %v1882, %v1891
        %v1898 = vadd.f32 %v1883, %v1894
        %s1899 = sld [smem:[#allocation8 + $0x13]]
        %v1900 = vstv %s1899
        %v1901 = vadd.f32 %v1897, %v1900
        %v1902 = vadd.f32 %v1898, %v1900
        %1905 = vrot.lane.b32.xlu0 %v1901, 2
        %v1906 = vpop.permute.xlu0 %1905
        %1907 = vrot.lane.b32.xlu0 %v1902, 2
        %v1908 = vpop.permute.xlu0 %1907
        %v1909 = vsel %vm292, %v1906, %v1908
        %1911 = vst [vmem:[#allocation3 + $0x8] sm:$0xff] %v1909
        %v1912 = vld [vmem:[#allocation3] sm:$0xff]
        %v1913 = vld [vmem:[#allocation3 + $0x8] sm:$0xff]
        %s1914 = sld [smem:[#allocation4 + $0x73]]
        %v1915 = vstv %s1914
        %v1916 = vmul.f32 %v1912, %v1915
        %v1917 = vmul.f32 %v1913, %v1915
        %s1918 = sld [smem:[#allocation4 + $0x74]]
        %v1919 = vstv %s1918
        %v1920 = vmul.f32 %v1912, %v1919
        %v1921 = vmul.f32 %v1913, %v1919
        %1924 = vrot.lane.b32.xlu0 %v1920, 127
        %v1925 = vpop.permute.xlu0 %1924
        %1926 = vrot.lane.b32.xlu0 %v1921, 127
        %v1927 = vpop.permute.xlu0 %1926
        %v1928 = vsel %vm235, %v1925, %v1927
        %v1931 = vadd.f32 %v1916, %v1928
        %v1932 = vadd.f32 %v1917, %v1927
        %s1933 = sld [smem:[#allocation4 + $0x75]]
        %v1934 = vstv %s1933
        %v1935 = vmul.f32 %v1913, %v1934
        %1937 = vrot.lane.b32.xlu0 %v1935, 126
        %v1938 = vpop.permute.xlu0 %1937
        %v1940 = vadd.f32 %v1931, %v1938
        %v1941 = vadd.f32 %v1932, %v1938
        %v1942 = vld [vmem:[#allocation3 + $0x8] sm:$0xff]
        %v1943 = vld [vmem:[#allocation3 + $0x10] sm:$0xff]
        %s1944 = sld [smem:[#allocation4 + $0x76]]
        %v1945 = vstv %s1944
        %v1946 = vmul.f32 %v1942, %v1945
        %v1947 = vmul.f32 %v1943, %v1945
        %1950 = vrot.lane.b32.xlu0 %v1946, 125
        %v1951 = vpop.permute.xlu0 %1950
        %1952 = vrot.lane.b32.xlu0 %v1947, 125
        %v1953 = vpop.permute.xlu0 %1952
        %v1954 = vsel %vm260, %v1951, %v1953
        %v1957 = vadd.f32 %v1940, %v1951
        %v1958 = vadd.f32 %v1941, %v1954
        %s1959 = sld [smem:[#allocation4 + $0x77]]
        %v1960 = vstv %s1959
        %v1961 = vmul.f32 %v1942, %v1960
        %v1962 = vmul.f32 %v1943, %v1960
        %1965 = vrot.lane.b32.xlu0 %v1961, 124
        %v1966 = vpop.permute.xlu0 %1965
        %1967 = vrot.lane.b32.xlu0 %v1962, 124
        %v1968 = vpop.permute.xlu0 %1967
        %v1969 = vsel %vm276, %v1966, %v1968
        %v1972 = vadd.f32 %v1957, %v1966
        %v1973 = vadd.f32 %v1958, %v1969
        %s1974 = sld [smem:[#allocation8 + $0x17]]
        %v1975 = vstv %s1974
        %v1976 = vadd.f32 %v1972, %v1975
        %v1977 = vadd.f32 %v1973, %v1975
        %1980 = vrot.lane.b32.xlu0 %v1976, 2
        %v1981 = vpop.permute.xlu0 %1980
        %1982 = vrot.lane.b32.xlu0 %v1977, 2
        %v1983 = vpop.permute.xlu0 %1982
        %v1984 = vsel %vm292, %v1981, %v1983
        %s1986 = scalar_lea.vmem %s208, 88 [#allocation11]
        %1987 = vst [vmem:[%s1986] sm:$0xff] %v1984
        %s1988 = sand.u32 %s98, 1
        %s1989 = scalar_lea.sflag [#allocation6], %s1988
        %s1990 = sand.u32 %s98, 1
        %s1991 = smul.addr %s1990, 96
        %s1992 = scalar_lea.vmem [#allocation11], %s1991
        // Predicated region
        $region45: #{dms_conv_forward.1} parent=31 // pred_check
          %p1993 = pneg %p108
        $region46: #{dms_conv_forward.1} parent=31 // pred_check_branch
          %1995 = sbr.rel (%p1993) target = $region48
        $region47: #{dms_conv_forward.1} parent=31 // pred_region
          %s1997 = ssub.s32 1536, 1536
          %1998 = vsyncadd %s1989, %s1997
          %s1999 = smul.addr %s22, 12
          %s2000 = smul.addr %s1999, 128
          %s2001 = scalar_lea.hbm %s3, %s2000
          %s2002 = sshll.u32 %s1992, 4
          %s2003 = int_to_ptr.vmem [resolvable:$true] %s2002
          %2008 = dma.vmem_to_hbm [thread:$0]  %s2003, 1536, %s2001, %s1989, 128, 128, 8
        $region48: #{dms_conv_forward.1} parent=31 // pred_fallthru
          _
      $region32: #{dms_conv_forward.1} parent=5 // pred_fallthru
        _
      %p2009 = scmp.le.s32.totalorder 2, %s17
      // Predicated region
      $region49: #{dms_conv_forward.1} parent=5 // pred_check
        %p2010 = pneg %p2009
      $region50: #{dms_conv_forward.1} parent=5 // pred_check_branch
        %2012 = sbr.rel (%p2010) target = $region52
      $region51: #{dms_conv_forward.1} parent=5 // pred_region
        %s2013 = ssub.s32 %s17, 2
        // Predicated region
        $region53: #{dms_conv_forward.1} parent=51 // pred_check
          %p2014 = pneg %p114
        $region54: #{dms_conv_forward.1} parent=51 // pred_check_branch
          %2016 = sbr.rel (%p2014) target = $region56
        $region55: #{dms_conv_forward.1} parent=51 // pred_region
          %s2017 = sand.u32 %s99, 1
          %s2018 = scalar_lea.sflag [#allocation6], %s2017
          %s2019 = sand.u32 %s99, 1
          %s2020 = smul.addr %s2019, 96
          %s2021 = scalar_lea.vmem [#allocation11], %s2020
          %2022 = dma.done %s2018, 1536
        $region56: #{dms_conv_forward.1} parent=51 // pred_fallthru
          _
      $region52: #{dms_conv_forward.1} parent=5 // pred_fallthru
        _
    $region6: #{dms_conv_forward.1} parent=1 // loop_footer
      %s21 = sadd.s32 1, %s17
    $region7: #{dms_conv_forward.1} parent=1 // loop_footer_branch
      %16 = sbr.rel target = $region3
    $region8: #{dms_conv_forward.1} parent=1 // loop_exit
      _
    %2023 = vsyncpa [#allocation5], 1
    %s2024 = scalar_lea.sflag [#allocation5], 1
    %2025 = vsyncpa %s2024, 1
    %2026 = vsyncpa [#allocation6], 1
    %s2027 = scalar_lea.sflag [#allocation6], 1
    %2028 = vsyncpa %s2027, 1
    %2029 = vsyncpa [#allocation7], 1
    %s2030 = scalar_lea.sflag [#allocation7], 1
    %2031 = vsyncpa %s2030, 1
    %2032 = vsyncpa [#allocation9], 1

</llo_original>
